<compile_context>
chip_gen: v5e
topology: v5e:2x2
jax: 0.10.0
libtpu: 0.0.40
codegen_flags: <defaults>
</compile_context>

<pallas_src>
import numpy as np
import jax
import jax.numpy as jnp
from jax import lax
from jax.experimental import pallas as pl
from jax.experimental.pallas import tpu as pltpu


# ----------------------------------------------------------------------------
# Schedule (numpy glue; mirrors DDPM.register_schedule / make_beta_schedule)
# ----------------------------------------------------------------------------
def build_schedule(timesteps, linear_start=0.1, linear_end=0.99, v_posterior=0.0):
    # beta_schedule == 'linear'
    betas = np.linspace(linear_start ** 0.5, linear_end ** 0.5, timesteps,
                        dtype=np.float64) ** 2
    alphas = 1.0 - betas
    alphas_cumprod = np.cumprod(alphas, axis=0)
    alphas_cumprod_prev = np.append(1.0, alphas_cumprod[:-1])
    posterior_variance = ((1.0 - v_posterior) * betas * (1.0 - alphas_cumprod_prev)
                          / (1.0 - alphas_cumprod) + v_posterior * betas)
    posterior_log_variance_clipped = np.log(np.maximum(posterior_variance, 1e-20))
    posterior_mean_coef1 = betas * np.sqrt(alphas_cumprod_prev) / (1.0 - alphas_cumprod)
    posterior_mean_coef2 = ((1.0 - alphas_cumprod_prev) * np.sqrt(alphas)
                            / (1.0 - alphas_cumprod))
    sigma = np.exp(0.5 * posterior_log_variance_clipped)  # (0.5*log_var).exp()
    return (posterior_mean_coef1.astype(np.float32),
            posterior_mean_coef2.astype(np.float32),
            sigma.astype(np.float32))


_UNROLL = 8  # bounded unroll; at realistic T (~1000) this keeps program size sane


# ----------------------------------------------------------------------------
# Fused Pallas kernel: condition MLP + full reverse-diffusion loop.
#
#   c   = tanh(img_flat @ Wcond + bcond)                      (condition)
#   cc  = c @ Wc + b                                          (loop-invariant, hoisted)
#   loop i = 0..T-1  (timestep t = T-1-i):
#     model_out = tanh(x @ Wx + cc + t_frac[t] * wt)          (synthetic denoise, 'x0')
#     mean      = coef1[t]*model_out + coef2[t]*x             (q_posterior)
#     x         = mean + noise[i] * sigma[t]                  (p_sample)
#
# noise stays in HBM and is manually double-buffered into VMEM, one (Bp, D) slice
# per step, overlapped with the step's compute.
# ----------------------------------------------------------------------------
def _ddpm_fused_kernel(sched_ref,                        # SMEM (4, T): coef1/coef2/sigma/t_frac (reversed)
                       img_ref, wcond_ref, bcond_ref,    # VMEM condition net (wcond bf16)
                       wx_ref, wc_ref, wt_ref, b_ref,    # VMEM denoise net (wx, wc bf16)
                       cdp0_ref,                         # VMEM (Bp, D) initial latent
                       noise_hbm,                        # ANY/HBM (T, Bp, D) per-step noise
                       out_ref,                          # VMEM (Bp, D) output
                       nbuf, nsem):                      # scratch: VMEM (2, Bp, D), DMA sems (2,)
    T = noise_hbm.shape[0]

    def fetch(step, slot):
        pltpu.make_async_copy(noise_hbm.at[step], nbuf.at[slot], nsem.at[slot]).start()

    # prime slot 0 while the condition MLP runs
    fetch(0, 0)

    # condition network, computed once (bf16 operands, f32 accumulation)
    c = jnp.tanh(
        jnp.dot(img_ref[...].astype(jnp.bfloat16), wcond_ref[...],
                preferred_element_type=jnp.float32)
        + bcond_ref[...])

    # hoisted loop-invariant part of the denoise model:  cc = c @ Wc + b
    cc = (jnp.dot(c.astype(jnp.bfloat16), wc_ref[...],
                  preferred_element_type=jnp.float32)
          + b_ref[...])

    wx = wx_ref[...]          # bf16 weight tile, re-used every step
    wt = wt_ref[...]          # f32 (1, D)

    def step(i, x):
        slot = i & 1
        # wait for this step's noise slice; prefetch the next one into the other slot
        pltpu.make_async_copy(noise_hbm.at[0], nbuf.at[slot], nsem.at[slot]).wait()

        @pl.when(i + 1 < T)
        def _():
            fetch(i + 1, 1 - slot)

        c1 = sched_ref[0, i]              # SMEM scalar reads
        c2 = sched_ref[1, i]
        sg = sched_ref[2, i]
        tf = sched_ref[3, i]

        h = (jnp.dot(x.astype(jnp.bfloat16), wx,
                     preferred_element_type=jnp.float32)
             + cc + tf * wt)
        model_out = jnp.tanh(h)           # parameterization == 'x0', clip_denoised == False
        mean = c1 * model_out + c2 * x    # q_posterior mean
        return mean + nbuf[slot] * sg     # p_sample reparameterized noise

    out_ref[...] = lax.fori_loop(0, T, step, cdp0_ref[...],
                                 unroll=min(T, _UNROLL))


def ddpm_forward_pallas(img_flat, cdp0, noise_rev, sched,
                        w_cond, b_cond, wx, wc, wt, b):
    Bp, D = cdp0.shape
    T = noise_rev.shape[0]
    vm = pl.BlockSpec(memory_space=pltpu.MemorySpace.VMEM)
    sm = pl.BlockSpec(memory_space=pltpu.MemorySpace.SMEM)
    hbm = pl.BlockSpec(memory_space=pl.ANY)
    return pl.pallas_call(
        _ddpm_fused_kernel,
        out_shape=jax.ShapeDtypeStruct((Bp, D), jnp.float32),
        in_specs=[sm, vm, vm, vm, vm, vm, vm, vm, vm, hbm],
        out_specs=vm,
        scratch_shapes=[pltpu.VMEM((2, Bp, D), jnp.float32),
                        pltpu.SemaphoreType.DMA((2,))],
    )(sched, img_flat,
      w_cond.astype(jnp.bfloat16), b_cond,
      wx.astype(jnp.bfloat16), wc.astype(jnp.bfloat16), wt, b,
      cdp0, noise_rev)


# ----------------------------------------------------------------------------
# Pure numpy (float64) reference with bf16-rounded matmul operands (matches the
# kernel's MXU inputs exactly; accumulation difference f32 vs f64 is negligible)
# ----------------------------------------------------------------------------
def _bf16_round_f64(a):
    return np.asarray(
        jnp.asarray(np.asarray(a), jnp.float32).astype(jnp.bfloat16).astype(jnp.float32),
        dtype=np.float64)


def ddpm_ref_np(img_flat, cdp0, noise_rev, c1, c2, sg, tf,
                w_cond, b_cond, wx, wc, wt, b):
    f = lambda a: np.asarray(a, dtype=np.float64)
    bf = _bf16_round_f64
    c = np.tanh(bf(img_flat) @ bf(w_cond) + f(b_cond))
    cc = bf(c) @ bf(wc) + f(b)
    x = f(cdp0)
    T = noise_rev.shape[0]
    for i in range(T):
        h = bf(x) @ bf(wx) + cc + float(tf[i]) * f(wt)
        model_out = np.tanh(h)
        mean = float(c1[i]) * model_out + float(c2[i]) * x
        x = mean + f(noise_rev[i]) * float(sg[i])
    return x


# ----------------------------------------------------------------------------
if __name__ == "__main__":
    B, C, H, W = 2, 4, 16, 16            # img: NCHW, like PyTorch
    feats = 32
    D = feats * 4                        # latent width = channels * 4 = 128 (lane-dense)
    T = 8                                # num_timesteps (small, synthetic)
    Bp = 8                               # batch padded to a full sublane tile
    F = C * H * W

    key = jax.random.PRNGKey(0)
    k = jax.random.split(key, 8)

    img = jax.random.normal(k[0], (B, C, H, W), jnp.float32)
    img_flat = img.reshape(B, F)

    # deterministic synthetic parameters (condition + denoise stand-ins)
    w_cond = jax.random.normal(k[1], (F, D), jnp.float32) * 0.02
    b_cond = jnp.zeros((1, D), jnp.float32)
    wx = jax.random.normal(k[2], (D, D), jnp.float32) * 0.1
    wc = jax.random.normal(k[3], (D, D), jnp.float32) * 0.1
    wt = jax.random.normal(k[4], (1, D), jnp.float32) * 0.1
    b = jnp.zeros((1, D), jnp.float32)

    # eval-branch initial latent + per-step noise (torch.randn / noise_like)
    cdp0 = jax.random.normal(k[5], (B, D), jnp.float32)
    noise_rev = jax.random.normal(k[6], (T, B, D), jnp.float32)  # index i == loop step i

    # schedule (linear_start=0.1, linear_end=0.99 — DDPM defaults), reversed so loop
    # step i corresponds to timestep t = T-1-i; packed (4, T) with T last for SMEM:
    # rows = [coef1, coef2, sigma, t_frac]
    coef1, coef2, sigma = build_schedule(T)
    c1_rev = np.ascontiguousarray(coef1[::-1])
    c2_rev = np.ascontiguousarray(coef2[::-1])
    sg_rev = np.ascontiguousarray(sigma[::-1])
    tf_rev = np.asarray([(T - 1 - i) / float(T) for i in range(T)], dtype=np.float32)
    sched = jnp.asarray(np.stack([c1_rev, c2_rev, sg_rev, tf_rev], axis=0))  # (4, T) f32

    # zero-pad the batch dimension to 8 sublanes (rows are independent)
    img_flat_p = jnp.zeros((Bp, F), jnp.float32).at[:B].set(img_flat)
    cdp0_p = jnp.zeros((Bp, D), jnp.float32).at[:B].set(cdp0)
    noise_p = jnp.zeros((T, Bp, D), jnp.float32).at[:, :B].set(noise_rev)

    # run the fused kernel
    out_p = ddpm_forward_pallas(img_flat_p, cdp0_p, noise_p, sched,
                                w_cond, b_cond, wx, wc, wt, b)
    out_p = jax.block_until_ready(out_p)
    out = np.asarray(out_p)[:B]

    # reference check (on the unpadded batch)
    ref = ddpm_ref_np(np.asarray(img_flat), np.asarray(cdp0), np.asarray(noise_rev),
                      c1_rev, c2_rev, sg_rev, tf_rev,
                      np.asarray(w_cond), np.asarray(b_cond), np.asarray(wx),
                      np.asarray(wc), np.asarray(wt), np.asarray(b))
    assert out.shape == (B, D)
    np.testing.assert_allclose(out, ref, rtol=2e-2, atol=2e-2)

    print("KERNEL_OK")
</pallas_src>

<mosaic_0001>
module attributes {stable_mosaic.version = 11 : i64} {
  func.func @_ddpm_fused_kernel(%arg0: memref<4x8xf32, #tpu.memory_space<smem>>, %arg1: memref<8x1024xf32, #tpu.memory_space<vmem>>, %arg2: memref<1024x128xbf16, #tpu.memory_space<vmem>>, %arg3: memref<1x128xf32, #tpu.memory_space<vmem>>, %arg4: memref<128x128xbf16, #tpu.memory_space<vmem>>, %arg5: memref<128x128xbf16, #tpu.memory_space<vmem>>, %arg6: memref<1x128xf32, #tpu.memory_space<vmem>>, %arg7: memref<1x128xf32, #tpu.memory_space<vmem>>, %arg8: memref<8x128xf32, #tpu.memory_space<vmem>>, %arg9: memref<8x8x128xf32, #tpu.memory_space<any>>, %arg10: memref<8x128xf32, #tpu.memory_space<vmem>>, %arg11: memref<2x8x128xf32, #tpu.memory_space<vmem>>, %arg12: memref<2x!tpu.dma_semaphore, #tpu.memory_space<semaphore_mem>>) attributes {dimension_semantics = [], scalar_prefetch = 0 : i64, scratch_operands = 2 : i64, tpu.core_type = #tpu.core_type<tc>} {
    %c0_i32 = arith.constant 0 : i32
    %c0_i32_0 = arith.constant 0 : i32
    %c0_i32_1 = arith.constant 0 : i32
    %c0_i32_2 = arith.constant 0 : i32
    %c0_i32_3 = arith.constant 0 : i32
    %0 = tpu.memref_slice %arg9[%c0_i32, %c0_i32_2, %c0_i32_3] : memref<8x8x128xf32, #tpu.memory_space<any>> -> memref<1x8x128xf32, #tpu.memory_space<any>>
    %1 = tpu.memref_squeeze %0 : memref<1x8x128xf32, #tpu.memory_space<any>> -> memref<8x128xf32, #tpu.memory_space<any>>
    %c0_i32_4 = arith.constant 0 : i32
    %c0_i32_5 = arith.constant 0 : i32
    %2 = tpu.memref_slice %arg11[%c0_i32_0, %c0_i32_4, %c0_i32_5] : memref<2x8x128xf32, #tpu.memory_space<vmem>> -> memref<1x8x128xf32, #tpu.memory_space<vmem>>
    %3 = tpu.memref_squeeze %2 : memref<1x8x128xf32, #tpu.memory_space<vmem>> -> memref<8x128xf32, #tpu.memory_space<vmem>>
    %4 = tpu.memref_slice %arg12[%c0_i32_1] : memref<2x!tpu.dma_semaphore, #tpu.memory_space<semaphore_mem>> -> memref<1x!tpu.dma_semaphore, #tpu.memory_space<semaphore_mem>>
    %5 = tpu.memref_squeeze %4 : memref<1x!tpu.dma_semaphore, #tpu.memory_space<semaphore_mem>> -> memref<!tpu.dma_semaphore, #tpu.memory_space<semaphore_mem>>
    tpu.enqueue_dma source(%1 : memref<8x128xf32, #tpu.memory_space<any>>) target(%3 : memref<8x128xf32, #tpu.memory_space<vmem>>) target_semaphore(%5 : memref<!tpu.dma_semaphore, #tpu.memory_space<semaphore_mem>>)
    %c0 = arith.constant 0 : index
    %c0_6 = arith.constant 0 : index
    %6 = vector.load %arg1[%c0, %c0_6] : memref<8x1024xf32, #tpu.memory_space<vmem>>, vector<8x1024xf32>
    %7 = arith.truncf %6 : vector<8x1024xf32> to vector<8x1024xbf16>
    %c0_7 = arith.constant 0 : index
    %c0_8 = arith.constant 0 : index
    %8 = vector.load %arg2[%c0_7, %c0_8] : memref<1024x128xbf16, #tpu.memory_space<vmem>>, vector<1024x128xbf16>
    %cst = arith.constant dense<0.000000e+00> : vector<8x128xf32>
    %9 = tpu.matmul %7, %8, %cst {dimension_numbers = #tpu.dot_dimension_numbers<[1], [0], [0], [1], [0, 0, 1, 1], [], []>} : vector<8x1024xbf16>, vector<1024x128xbf16>, vector<8x128xf32> -> vector<8x128xf32>
    %c0_9 = arith.constant 0 : index
    %c0_10 = arith.constant 0 : index
    %10 = vector.load %arg3[%c0_9, %c0_10] : memref<1x128xf32, #tpu.memory_space<vmem>>, vector<1x128xf32>
    %11 = vector.broadcast %10 : vector<1x128xf32> to vector<8x128xf32>
    %12 = arith.addf %9, %11 : vector<8x128xf32>
    %13 = math.tanh %12 : vector<8x128xf32>
    %14 = arith.truncf %13 : vector<8x128xf32> to vector<8x128xbf16>
    %c0_11 = arith.constant 0 : index
    %c0_12 = arith.constant 0 : index
    %15 = vector.load %arg5[%c0_11, %c0_12] : memref<128x128xbf16, #tpu.memory_space<vmem>>, vector<128x128xbf16>
    %cst_13 = arith.constant dense<0.000000e+00> : vector<8x128xf32>
    %16 = tpu.matmul %14, %15, %cst_13 {dimension_numbers = #tpu.dot_dimension_numbers<[1], [0], [0], [1], [0, 0, 1, 1], [], []>} : vector<8x128xbf16>, vector<128x128xbf16>, vector<8x128xf32> -> vector<8x128xf32>
    %c0_14 = arith.constant 0 : index
    %c0_15 = arith.constant 0 : index
    %17 = vector.load %arg7[%c0_14, %c0_15] : memref<1x128xf32, #tpu.memory_space<vmem>>, vector<1x128xf32>
    %18 = vector.broadcast %17 : vector<1x128xf32> to vector<8x128xf32>
    %19 = arith.addf %16, %18 : vector<8x128xf32>
    %c0_16 = arith.constant 0 : index
    %c0_17 = arith.constant 0 : index
    %20 = vector.load %arg4[%c0_16, %c0_17] : memref<128x128xbf16, #tpu.memory_space<vmem>>, vector<128x128xbf16>
    %c0_18 = arith.constant 0 : index
    %c0_19 = arith.constant 0 : index
    %21 = vector.load %arg6[%c0_18, %c0_19] : memref<1x128xf32, #tpu.memory_space<vmem>>, vector<1x128xf32>
    %c0_20 = arith.constant 0 : index
    %c0_21 = arith.constant 0 : index
    %22 = vector.load %arg8[%c0_20, %c0_21] : memref<8x128xf32, #tpu.memory_space<vmem>>, vector<8x128xf32>
    %c0_i32_22 = arith.constant 0 : i32
    %c1_i32 = arith.constant 1 : i32
    %23 = arith.andi %c0_i32_22, %c1_i32 : i32
    %c0_i32_23 = arith.constant 0 : i32
    %c0_i32_24 = arith.constant 0 : i32
    %c0_i32_25 = arith.constant 0 : i32
    %24 = tpu.memref_slice %arg9[%c0_i32_23, %c0_i32_24, %c0_i32_25] : memref<8x8x128xf32, #tpu.memory_space<any>> -> memref<1x8x128xf32, #tpu.memory_space<any>>
    %25 = tpu.memref_squeeze %24 : memref<1x8x128xf32, #tpu.memory_space<any>> -> memref<8x128xf32, #tpu.memory_space<any>>
    %c0_i32_26 = arith.constant 0 : i32
    %c0_i32_27 = arith.constant 0 : i32
    %26 = tpu.memref_slice %arg11[%23, %c0_i32_26, %c0_i32_27] : memref<2x8x128xf32, #tpu.memory_space<vmem>> -> memref<1x8x128xf32, #tpu.memory_space<vmem>>
    %27 = tpu.memref_squeeze %26 : memref<1x8x128xf32, #tpu.memory_space<vmem>> -> memref<8x128xf32, #tpu.memory_space<vmem>>
    %28 = tpu.memref_slice %arg12[%23] : memref<2x!tpu.dma_semaphore, #tpu.memory_space<semaphore_mem>> -> memref<1x!tpu.dma_semaphore, #tpu.memory_space<semaphore_mem>>
    %29 = tpu.memref_squeeze %28 : memref<1x!tpu.dma_semaphore, #tpu.memory_space<semaphore_mem>> -> memref<!tpu.dma_semaphore, #tpu.memory_space<semaphore_mem>>
    tpu.wait_dma2 semaphore(%29 : memref<!tpu.dma_semaphore, #tpu.memory_space<semaphore_mem>>) src(%25 : memref<8x128xf32, #tpu.memory_space<any>>) dst(%27 : memref<8x128xf32, #tpu.memory_space<vmem>>)
    %c1_i32_28 = arith.constant 1 : i32
    %30 = arith.addi %c0_i32_22, %c1_i32_28 : i32
    %c8_i32 = arith.constant 8 : i32
    %31 = arith.cmpi slt, %30, %c8_i32 : i32
    %32 = arith.extui %31 : i1 to i32
    %c0_i32_29 = arith.constant 0 : i32
    %33 = arith.cmpi ne, %32, %c0_i32_29 : i32
    scf.if %33 {
      %c1_i32_150 = arith.constant 1 : i32
      %328 = arith.addi %c0_i32_22, %c1_i32_150 : i32
      %c1_i32_151 = arith.constant 1 : i32
      %329 = arith.subi %c1_i32_151, %23 : i32
      %c0_i32_152 = arith.constant 0 : i32
      %c0_i32_153 = arith.constant 0 : i32
      %330 = tpu.memref_slice %arg9[%328, %c0_i32_152, %c0_i32_153] : memref<8x8x128xf32, #tpu.memory_space<any>> -> memref<1x8x128xf32, #tpu.memory_space<any>>
      %331 = tpu.memref_squeeze %330 : memref<1x8x128xf32, #tpu.memory_space<any>> -> memref<8x128xf32, #tpu.memory_space<any>>
      %c0_i32_154 = arith.constant 0 : i32
      %c0_i32_155 = arith.constant 0 : i32
      %332 = tpu.memref_slice %arg11[%329, %c0_i32_154, %c0_i32_155] : memref<2x8x128xf32, #tpu.memory_space<vmem>> -> memref<1x8x128xf32, #tpu.memory_space<vmem>>
      %333 = tpu.memref_squeeze %332 : memref<1x8x128xf32, #tpu.memory_space<vmem>> -> memref<8x128xf32, #tpu.memory_space<vmem>>
      %334 = tpu.memref_slice %arg12[%329] : memref<2x!tpu.dma_semaphore, #tpu.memory_space<semaphore_mem>> -> memref<1x!tpu.dma_semaphore, #tpu.memory_space<semaphore_mem>>
      %335 = tpu.memref_squeeze %334 : memref<1x!tpu.dma_semaphore, #tpu.memory_space<semaphore_mem>> -> memref<!tpu.dma_semaphore, #tpu.memory_space<semaphore_mem>>
      tpu.enqueue_dma source(%331 : memref<8x128xf32, #tpu.memory_space<any>>) target(%333 : memref<8x128xf32, #tpu.memory_space<vmem>>) target_semaphore(%335 : memref<!tpu.dma_semaphore, #tpu.memory_space<semaphore_mem>>)
    } else {
    }
    %c0_30 = arith.constant 0 : index
    %34 = arith.index_cast %c0_i32_22 : i32 to index
    %35 = memref.load %arg0[%c0_30, %34] : memref<4x8xf32, #tpu.memory_space<smem>>
    %c1 = arith.constant 1 : index
    %36 = arith.index_cast %c0_i32_22 : i32 to index
    %37 = memref.load %arg0[%c1, %36] : memref<4x8xf32, #tpu.memory_space<smem>>
    %c2 = arith.constant 2 : index
    %38 = arith.index_cast %c0_i32_22 : i32 to index
    %39 = memref.load %arg0[%c2, %38] : memref<4x8xf32, #tpu.memory_space<smem>>
    %c3 = arith.constant 3 : index
    %40 = arith.index_cast %c0_i32_22 : i32 to index
    %41 = memref.load %arg0[%c3, %40] : memref<4x8xf32, #tpu.memory_space<smem>>
    %42 = arith.truncf %22 : vector<8x128xf32> to vector<8x128xbf16>
    %cst_31 = arith.constant dense<0.000000e+00> : vector<8x128xf32>
    %43 = tpu.matmul %42, %20, %cst_31 {dimension_numbers = #tpu.dot_dimension_numbers<[1], [0], [0], [1], [0, 0, 1, 1], [], []>} : vector<8x128xbf16>, vector<128x128xbf16>, vector<8x128xf32> -> vector<8x128xf32>
    %44 = arith.addf %43, %19 : vector<8x128xf32>
    %45 = vector.broadcast %41 : f32 to vector<1x128xf32>
    %46 = arith.mulf %45, %21 : vector<1x128xf32>
    %47 = vector.broadcast %46 : vector<1x128xf32> to vector<8x128xf32>
    %48 = arith.addf %44, %47 : vector<8x128xf32>
    %49 = math.tanh %48 : vector<8x128xf32>
    %50 = vector.broadcast %35 : f32 to vector<8x128xf32>
    %51 = arith.mulf %50, %49 : vector<8x128xf32>
    %52 = vector.broadcast %37 : f32 to vector<8x128xf32>
    %53 = arith.mulf %52, %22 : vector<8x128xf32>
    %54 = arith.addf %51, %53 : vector<8x128xf32>
    %55 = arith.index_cast %23 : i32 to index
    %c0_32 = arith.constant 0 : index
    %c0_33 = arith.constant 0 : index
    %56 = vector.load %arg11[%55, %c0_32, %c0_33] : memref<2x8x128xf32, #tpu.memory_space<vmem>>, vector<1x8x128xf32>
    %57 = vector.shape_cast %56 : vector<1x8x128xf32> to vector<8x128xf32>
    %58 = vector.broadcast %39 : f32 to vector<8x128xf32>
    %59 = arith.mulf %57, %58 : vector<8x128xf32>
    %60 = arith.addf %54, %59 : vector<8x128xf32>
    %c1_i32_34 = arith.constant 1 : i32
    %c1_i32_35 = arith.constant 1 : i32
    %61 = arith.andi %c1_i32_34, %c1_i32_35 : i32
    %c0_i32_36 = arith.constant 0 : i32
    %c0_i32_37 = arith.constant 0 : i32
    %c0_i32_38 = arith.constant 0 : i32
    %62 = tpu.memref_slice %arg9[%c0_i32_36, %c0_i32_37, %c0_i32_38] : memref<8x8x128xf32, #tpu.memory_space<any>> -> memref<1x8x128xf32, #tpu.memory_space<any>>
    %63 = tpu.memref_squeeze %62 : memref<1x8x128xf32, #tpu.memory_space<any>> -> memref<8x128xf32, #tpu.memory_space<any>>
    %c0_i32_39 = arith.constant 0 : i32
    %c0_i32_40 = arith.constant 0 : i32
    %64 = tpu.memref_slice %arg11[%61, %c0_i32_39, %c0_i32_40] : memref<2x8x128xf32, #tpu.memory_space<vmem>> -> memref<1x8x128xf32, #tpu.memory_space<vmem>>
    %65 = tpu.memref_squeeze %64 : memref<1x8x128xf32, #tpu.memory_space<vmem>> -> memref<8x128xf32, #tpu.memory_space<vmem>>
    %66 = tpu.memref_slice %arg12[%61] : memref<2x!tpu.dma_semaphore, #tpu.memory_space<semaphore_mem>> -> memref<1x!tpu.dma_semaphore, #tpu.memory_space<semaphore_mem>>
    %67 = tpu.memref_squeeze %66 : memref<1x!tpu.dma_semaphore, #tpu.memory_space<semaphore_mem>> -> memref<!tpu.dma_semaphore, #tpu.memory_space<semaphore_mem>>
    tpu.wait_dma2 semaphore(%67 : memref<!tpu.dma_semaphore, #tpu.memory_space<semaphore_mem>>) src(%63 : memref<8x128xf32, #tpu.memory_space<any>>) dst(%65 : memref<8x128xf32, #tpu.memory_space<vmem>>)
    %c1_i32_41 = arith.constant 1 : i32
    %68 = arith.addi %c1_i32_34, %c1_i32_41 : i32
    %c8_i32_42 = arith.constant 8 : i32
    %69 = arith.cmpi slt, %68, %c8_i32_42 : i32
    %70 = arith.extui %69 : i1 to i32
    %c0_i32_43 = arith.constant 0 : i32
    %71 = arith.cmpi ne, %70, %c0_i32_43 : i32
    scf.if %71 {
      %c1_i32_150 = arith.constant 1 : i32
      %328 = arith.addi %c1_i32_34, %c1_i32_150 : i32
      %c1_i32_151 = arith.constant 1 : i32
      %329 = arith.subi %c1_i32_151, %61 : i32
      %c0_i32_152 = arith.constant 0 : i32
      %c0_i32_153 = arith.constant 0 : i32
      %330 = tpu.memref_slice %arg9[%328, %c0_i32_152, %c0_i32_153] : memref<8x8x128xf32, #tpu.memory_space<any>> -> memref<1x8x128xf32, #tpu.memory_space<any>>
      %331 = tpu.memref_squeeze %330 : memref<1x8x128xf32, #tpu.memory_space<any>> -> memref<8x128xf32, #tpu.memory_space<any>>
      %c0_i32_154 = arith.constant 0 : i32
      %c0_i32_155 = arith.constant 0 : i32
      %332 = tpu.memref_slice %arg11[%329, %c0_i32_154, %c0_i32_155] : memref<2x8x128xf32, #tpu.memory_space<vmem>> -> memref<1x8x128xf32, #tpu.memory_space<vmem>>
      %333 = tpu.memref_squeeze %332 : memref<1x8x128xf32, #tpu.memory_space<vmem>> -> memref<8x128xf32, #tpu.memory_space<vmem>>
      %334 = tpu.memref_slice %arg12[%329] : memref<2x!tpu.dma_semaphore, #tpu.memory_space<semaphore_mem>> -> memref<1x!tpu.dma_semaphore, #tpu.memory_space<semaphore_mem>>
      %335 = tpu.memref_squeeze %334 : memref<1x!tpu.dma_semaphore, #tpu.memory_space<semaphore_mem>> -> memref<!tpu.dma_semaphore, #tpu.memory_space<semaphore_mem>>
      tpu.enqueue_dma source(%331 : memref<8x128xf32, #tpu.memory_space<any>>) target(%333 : memref<8x128xf32, #tpu.memory_space<vmem>>) target_semaphore(%335 : memref<!tpu.dma_semaphore, #tpu.memory_space<semaphore_mem>>)
    } else {
    }
    %c0_44 = arith.constant 0 : index
    %72 = arith.index_cast %c1_i32_34 : i32 to index
    %73 = memref.load %arg0[%c0_44, %72] : memref<4x8xf32, #tpu.memory_space<smem>>
    %c1_45 = arith.constant 1 : index
    %74 = arith.index_cast %c1_i32_34 : i32 to index
    %75 = memref.load %arg0[%c1_45, %74] : memref<4x8xf32, #tpu.memory_space<smem>>
    %c2_46 = arith.constant 2 : index
    %76 = arith.index_cast %c1_i32_34 : i32 to index
    %77 = memref.load %arg0[%c2_46, %76] : memref<4x8xf32, #tpu.memory_space<smem>>
    %c3_47 = arith.constant 3 : index
    %78 = arith.index_cast %c1_i32_34 : i32 to index
    %79 = memref.load %arg0[%c3_47, %78] : memref<4x8xf32, #tpu.memory_space<smem>>
    %80 = arith.truncf %60 : vector<8x128xf32> to vector<8x128xbf16>
    %cst_48 = arith.constant dense<0.000000e+00> : vector<8x128xf32>
    %81 = tpu.matmul %80, %20, %cst_48 {dimension_numbers = #tpu.dot_dimension_numbers<[1], [0], [0], [1], [0, 0, 1, 1], [], []>} : vector<8x128xbf16>, vector<128x128xbf16>, vector<8x128xf32> -> vector<8x128xf32>
    %82 = arith.addf %81, %19 : vector<8x128xf32>
    %83 = vector.broadcast %79 : f32 to vector<1x128xf32>
    %84 = arith.mulf %83, %21 : vector<1x128xf32>
    %85 = vector.broadcast %84 : vector<1x128xf32> to vector<8x128xf32>
    %86 = arith.addf %82, %85 : vector<8x128xf32>
    %87 = math.tanh %86 : vector<8x128xf32>
    %88 = vector.broadcast %73 : f32 to vector<8x128xf32>
    %89 = arith.mulf %88, %87 : vector<8x128xf32>
    %90 = vector.broadcast %75 : f32 to vector<8x128xf32>
    %91 = arith.mulf %90, %60 : vector<8x128xf32>
    %92 = arith.addf %89, %91 : vector<8x128xf32>
    %93 = arith.index_cast %61 : i32 to index
    %c0_49 = arith.constant 0 : index
    %c0_50 = arith.constant 0 : index
    %94 = vector.load %arg11[%93, %c0_49, %c0_50] : memref<2x8x128xf32, #tpu.memory_space<vmem>>, vector<1x8x128xf32>
    %95 = vector.shape_cast %94 : vector<1x8x128xf32> to vector<8x128xf32>
    %96 = vector.broadcast %77 : f32 to vector<8x128xf32>
    %97 = arith.mulf %95, %96 : vector<8x128xf32>
    %98 = arith.addf %92, %97 : vector<8x128xf32>
    %c2_i32 = arith.constant 2 : i32
    %c1_i32_51 = arith.constant 1 : i32
    %99 = arith.andi %c2_i32, %c1_i32_51 : i32
    %c0_i32_52 = arith.constant 0 : i32
    %c0_i32_53 = arith.constant 0 : i32
    %c0_i32_54 = arith.constant 0 : i32
    %100 = tpu.memref_slice %arg9[%c0_i32_52, %c0_i32_53, %c0_i32_54] : memref<8x8x128xf32, #tpu.memory_space<any>> -> memref<1x8x128xf32, #tpu.memory_space<any>>
    %101 = tpu.memref_squeeze %100 : memref<1x8x128xf32, #tpu.memory_space<any>> -> memref<8x128xf32, #tpu.memory_space<any>>
    %c0_i32_55 = arith.constant 0 : i32
    %c0_i32_56 = arith.constant 0 : i32
    %102 = tpu.memref_slice %arg11[%99, %c0_i32_55, %c0_i32_56] : memref<2x8x128xf32, #tpu.memory_space<vmem>> -> memref<1x8x128xf32, #tpu.memory_space<vmem>>
    %103 = tpu.memref_squeeze %102 : memref<1x8x128xf32, #tpu.memory_space<vmem>> -> memref<8x128xf32, #tpu.memory_space<vmem>>
    %104 = tpu.memref_slice %arg12[%99] : memref<2x!tpu.dma_semaphore, #tpu.memory_space<semaphore_mem>> -> memref<1x!tpu.dma_semaphore, #tpu.memory_space<semaphore_mem>>
    %105 = tpu.memref_squeeze %104 : memref<1x!tpu.dma_semaphore, #tpu.memory_space<semaphore_mem>> -> memref<!tpu.dma_semaphore, #tpu.memory_space<semaphore_mem>>
    tpu.wait_dma2 semaphore(%105 : memref<!tpu.dma_semaphore, #tpu.memory_space<semaphore_mem>>) src(%101 : memref<8x128xf32, #tpu.memory_space<any>>) dst(%103 : memref<8x128xf32, #tpu.memory_space<vmem>>)
    %c1_i32_57 = arith.constant 1 : i32
    %106 = arith.addi %c2_i32, %c1_i32_57 : i32
    %c8_i32_58 = arith.constant 8 : i32
    %107 = arith.cmpi slt, %106, %c8_i32_58 : i32
    %108 = arith.extui %107 : i1 to i32
    %c0_i32_59 = arith.constant 0 : i32
    %109 = arith.cmpi ne, %108, %c0_i32_59 : i32
    scf.if %109 {
      %c1_i32_150 = arith.constant 1 : i32
      %328 = arith.addi %c2_i32, %c1_i32_150 : i32
      %c1_i32_151 = arith.constant 1 : i32
      %329 = arith.subi %c1_i32_151, %99 : i32
      %c0_i32_152 = arith.constant 0 : i32
      %c0_i32_153 = arith.constant 0 : i32
      %330 = tpu.memref_slice %arg9[%328, %c0_i32_152, %c0_i32_153] : memref<8x8x128xf32, #tpu.memory_space<any>> -> memref<1x8x128xf32, #tpu.memory_space<any>>
      %331 = tpu.memref_squeeze %330 : memref<1x8x128xf32, #tpu.memory_space<any>> -> memref<8x128xf32, #tpu.memory_space<any>>
      %c0_i32_154 = arith.constant 0 : i32
      %c0_i32_155 = arith.constant 0 : i32
      %332 = tpu.memref_slice %arg11[%329, %c0_i32_154, %c0_i32_155] : memref<2x8x128xf32, #tpu.memory_space<vmem>> -> memref<1x8x128xf32, #tpu.memory_space<vmem>>
      %333 = tpu.memref_squeeze %332 : memref<1x8x128xf32, #tpu.memory_space<vmem>> -> memref<8x128xf32, #tpu.memory_space<vmem>>
      %334 = tpu.memref_slice %arg12[%329] : memref<2x!tpu.dma_semaphore, #tpu.memory_space<semaphore_mem>> -> memref<1x!tpu.dma_semaphore, #tpu.memory_space<semaphore_mem>>
      %335 = tpu.memref_squeeze %334 : memref<1x!tpu.dma_semaphore, #tpu.memory_space<semaphore_mem>> -> memref<!tpu.dma_semaphore, #tpu.memory_space<semaphore_mem>>
      tpu.enqueue_dma source(%331 : memref<8x128xf32, #tpu.memory_space<any>>) target(%333 : memref<8x128xf32, #tpu.memory_space<vmem>>) target_semaphore(%335 : memref<!tpu.dma_semaphore, #tpu.memory_space<semaphore_mem>>)
    } else {
    }
    %c0_60 = arith.constant 0 : index
    %110 = arith.index_cast %c2_i32 : i32 to index
    %111 = memref.load %arg0[%c0_60, %110] : memref<4x8xf32, #tpu.memory_space<smem>>
    %c1_61 = arith.constant 1 : index
    %112 = arith.index_cast %c2_i32 : i32 to index
    %113 = memref.load %arg0[%c1_61, %112] : memref<4x8xf32, #tpu.memory_space<smem>>
    %c2_62 = arith.constant 2 : index
    %114 = arith.index_cast %c2_i32 : i32 to index
    %115 = memref.load %arg0[%c2_62, %114] : memref<4x8xf32, #tpu.memory_space<smem>>
    %c3_63 = arith.constant 3 : index
    %116 = arith.index_cast %c2_i32 : i32 to index
    %117 = memref.load %arg0[%c3_63, %116] : memref<4x8xf32, #tpu.memory_space<smem>>
    %118 = arith.truncf %98 : vector<8x128xf32> to vector<8x128xbf16>
    %cst_64 = arith.constant dense<0.000000e+00> : vector<8x128xf32>
    %119 = tpu.matmul %118, %20, %cst_64 {dimension_numbers = #tpu.dot_dimension_numbers<[1], [0], [0], [1], [0, 0, 1, 1], [], []>} : vector<8x128xbf16>, vector<128x128xbf16>, vector<8x128xf32> -> vector<8x128xf32>
    %120 = arith.addf %119, %19 : vector<8x128xf32>
    %121 = vector.broadcast %117 : f32 to vector<1x128xf32>
    %122 = arith.mulf %121, %21 : vector<1x128xf32>
    %123 = vector.broadcast %122 : vector<1x128xf32> to vector<8x128xf32>
    %124 = arith.addf %120, %123 : vector<8x128xf32>
    %125 = math.tanh %124 : vector<8x128xf32>
    %126 = vector.broadcast %111 : f32 to vector<8x128xf32>
    %127 = arith.mulf %126, %125 : vector<8x128xf32>
    %128 = vector.broadcast %113 : f32 to vector<8x128xf32>
    %129 = arith.mulf %128, %98 : vector<8x128xf32>
    %130 = arith.addf %127, %129 : vector<8x128xf32>
    %131 = arith.index_cast %99 : i32 to index
    %c0_65 = arith.constant 0 : index
    %c0_66 = arith.constant 0 : index
    %132 = vector.load %arg11[%131, %c0_65, %c0_66] : memref<2x8x128xf32, #tpu.memory_space<vmem>>, vector<1x8x128xf32>
    %133 = vector.shape_cast %132 : vector<1x8x128xf32> to vector<8x128xf32>
    %134 = vector.broadcast %115 : f32 to vector<8x128xf32>
    %135 = arith.mulf %133, %134 : vector<8x128xf32>
    %136 = arith.addf %130, %135 : vector<8x128xf32>
    %c3_i32 = arith.constant 3 : i32
    %c1_i32_67 = arith.constant 1 : i32
    %137 = arith.andi %c3_i32, %c1_i32_67 : i32
    %c0_i32_68 = arith.constant 0 : i32
    %c0_i32_69 = arith.constant 0 : i32
    %c0_i32_70 = arith.constant 0 : i32
    %138 = tpu.memref_slice %arg9[%c0_i32_68, %c0_i32_69, %c0_i32_70] : memref<8x8x128xf32, #tpu.memory_space<any>> -> memref<1x8x128xf32, #tpu.memory_space<any>>
    %139 = tpu.memref_squeeze %138 : memref<1x8x128xf32, #tpu.memory_space<any>> -> memref<8x128xf32, #tpu.memory_space<any>>
    %c0_i32_71 = arith.constant 0 : i32
    %c0_i32_72 = arith.constant 0 : i32
    %140 = tpu.memref_slice %arg11[%137, %c0_i32_71, %c0_i32_72] : memref<2x8x128xf32, #tpu.memory_space<vmem>> -> memref<1x8x128xf32, #tpu.memory_space<vmem>>
    %141 = tpu.memref_squeeze %140 : memref<1x8x128xf32, #tpu.memory_space<vmem>> -> memref<8x128xf32, #tpu.memory_space<vmem>>
    %142 = tpu.memref_slice %arg12[%137] : memref<2x!tpu.dma_semaphore, #tpu.memory_space<semaphore_mem>> -> memref<1x!tpu.dma_semaphore, #tpu.memory_space<semaphore_mem>>
    %143 = tpu.memref_squeeze %142 : memref<1x!tpu.dma_semaphore, #tpu.memory_space<semaphore_mem>> -> memref<!tpu.dma_semaphore, #tpu.memory_space<semaphore_mem>>
    tpu.wait_dma2 semaphore(%143 : memref<!tpu.dma_semaphore, #tpu.memory_space<semaphore_mem>>) src(%139 : memref<8x128xf32, #tpu.memory_space<any>>) dst(%141 : memref<8x128xf32, #tpu.memory_space<vmem>>)
    %c1_i32_73 = arith.constant 1 : i32
    %144 = arith.addi %c3_i32, %c1_i32_73 : i32
    %c8_i32_74 = arith.constant 8 : i32
    %145 = arith.cmpi slt, %144, %c8_i32_74 : i32
    %146 = arith.extui %145 : i1 to i32
    %c0_i32_75 = arith.constant 0 : i32
    %147 = arith.cmpi ne, %146, %c0_i32_75 : i32
    scf.if %147 {
      %c1_i32_150 = arith.constant 1 : i32
      %328 = arith.addi %c3_i32, %c1_i32_150 : i32
      %c1_i32_151 = arith.constant 1 : i32
      %329 = arith.subi %c1_i32_151, %137 : i32
      %c0_i32_152 = arith.constant 0 : i32
      %c0_i32_153 = arith.constant 0 : i32
      %330 = tpu.memref_slice %arg9[%328, %c0_i32_152, %c0_i32_153] : memref<8x8x128xf32, #tpu.memory_space<any>> -> memref<1x8x128xf32, #tpu.memory_space<any>>
      %331 = tpu.memref_squeeze %330 : memref<1x8x128xf32, #tpu.memory_space<any>> -> memref<8x128xf32, #tpu.memory_space<any>>
      %c0_i32_154 = arith.constant 0 : i32
      %c0_i32_155 = arith.constant 0 : i32
      %332 = tpu.memref_slice %arg11[%329, %c0_i32_154, %c0_i32_155] : memref<2x8x128xf32, #tpu.memory_space<vmem>> -> memref<1x8x128xf32, #tpu.memory_space<vmem>>
      %333 = tpu.memref_squeeze %332 : memref<1x8x128xf32, #tpu.memory_space<vmem>> -> memref<8x128xf32, #tpu.memory_space<vmem>>
      %334 = tpu.memref_slice %arg12[%329] : memref<2x!tpu.dma_semaphore, #tpu.memory_space<semaphore_mem>> -> memref<1x!tpu.dma_semaphore, #tpu.memory_space<semaphore_mem>>
      %335 = tpu.memref_squeeze %334 : memref<1x!tpu.dma_semaphore, #tpu.memory_space<semaphore_mem>> -> memref<!tpu.dma_semaphore, #tpu.memory_space<semaphore_mem>>
      tpu.enqueue_dma source(%331 : memref<8x128xf32, #tpu.memory_space<any>>) target(%333 : memref<8x128xf32, #tpu.memory_space<vmem>>) target_semaphore(%335 : memref<!tpu.dma_semaphore, #tpu.memory_space<semaphore_mem>>)
    } else {
    }
    %c0_76 = arith.constant 0 : index
    %148 = arith.index_cast %c3_i32 : i32 to index
    %149 = memref.load %arg0[%c0_76, %148] : memref<4x8xf32, #tpu.memory_space<smem>>
    %c1_77 = arith.constant 1 : index
    %150 = arith.index_cast %c3_i32 : i32 to index
    %151 = memref.load %arg0[%c1_77, %150] : memref<4x8xf32, #tpu.memory_space<smem>>
    %c2_78 = arith.constant 2 : index
    %152 = arith.index_cast %c3_i32 : i32 to index
    %153 = memref.load %arg0[%c2_78, %152] : memref<4x8xf32, #tpu.memory_space<smem>>
    %c3_79 = arith.constant 3 : index
    %154 = arith.index_cast %c3_i32 : i32 to index
    %155 = memref.load %arg0[%c3_79, %154] : memref<4x8xf32, #tpu.memory_space<smem>>
    %156 = arith.truncf %136 : vector<8x128xf32> to vector<8x128xbf16>
    %cst_80 = arith.constant dense<0.000000e+00> : vector<8x128xf32>
    %157 = tpu.matmul %156, %20, %cst_80 {dimension_numbers = #tpu.dot_dimension_numbers<[1], [0], [0], [1], [0, 0, 1, 1], [], []>} : vector<8x128xbf16>, vector<128x128xbf16>, vector<8x128xf32> -> vector<8x128xf32>
    %158 = arith.addf %157, %19 : vector<8x128xf32>
    %159 = vector.broadcast %155 : f32 to vector<1x128xf32>
    %160 = arith.mulf %159, %21 : vector<1x128xf32>
    %161 = vector.broadcast %160 : vector<1x128xf32> to vector<8x128xf32>
    %162 = arith.addf %158, %161 : vector<8x128xf32>
    %163 = math.tanh %162 : vector<8x128xf32>
    %164 = vector.broadcast %149 : f32 to vector<8x128xf32>
    %165 = arith.mulf %164, %163 : vector<8x128xf32>
    %166 = vector.broadcast %151 : f32 to vector<8x128xf32>
    %167 = arith.mulf %166, %136 : vector<8x128xf32>
    %168 = arith.addf %165, %167 : vector<8x128xf32>
    %169 = arith.index_cast %137 : i32 to index
    %c0_81 = arith.constant 0 : index
    %c0_82 = arith.constant 0 : index
    %170 = vector.load %arg11[%169, %c0_81, %c0_82] : memref<2x8x128xf32, #tpu.memory_space<vmem>>, vector<1x8x128xf32>
    %171 = vector.shape_cast %170 : vector<1x8x128xf32> to vector<8x128xf32>
    %172 = vector.broadcast %153 : f32 to vector<8x128xf32>
    %173 = arith.mulf %171, %172 : vector<8x128xf32>
    %174 = arith.addf %168, %173 : vector<8x128xf32>
    %c4_i32 = arith.constant 4 : i32
    %c1_i32_83 = arith.constant 1 : i32
    %175 = arith.andi %c4_i32, %c1_i32_83 : i32
    %c0_i32_84 = arith.constant 0 : i32
    %c0_i32_85 = arith.constant 0 : i32
    %c0_i32_86 = arith.constant 0 : i32
    %176 = tpu.memref_slice %arg9[%c0_i32_84, %c0_i32_85, %c0_i32_86] : memref<8x8x128xf32, #tpu.memory_space<any>> -> memref<1x8x128xf32, #tpu.memory_space<any>>
    %177 = tpu.memref_squeeze %176 : memref<1x8x128xf32, #tpu.memory_space<any>> -> memref<8x128xf32, #tpu.memory_space<any>>
    %c0_i32_87 = arith.constant 0 : i32
    %c0_i32_88 = arith.constant 0 : i32
    %178 = tpu.memref_slice %arg11[%175, %c0_i32_87, %c0_i32_88] : memref<2x8x128xf32, #tpu.memory_space<vmem>> -> memref<1x8x128xf32, #tpu.memory_space<vmem>>
    %179 = tpu.memref_squeeze %178 : memref<1x8x128xf32, #tpu.memory_space<vmem>> -> memref<8x128xf32, #tpu.memory_space<vmem>>
    %180 = tpu.memref_slice %arg12[%175] : memref<2x!tpu.dma_semaphore, #tpu.memory_space<semaphore_mem>> -> memref<1x!tpu.dma_semaphore, #tpu.memory_space<semaphore_mem>>
    %181 = tpu.memref_squeeze %180 : memref<1x!tpu.dma_semaphore, #tpu.memory_space<semaphore_mem>> -> memref<!tpu.dma_semaphore, #tpu.memory_space<semaphore_mem>>
    tpu.wait_dma2 semaphore(%181 : memref<!tpu.dma_semaphore, #tpu.memory_space<semaphore_mem>>) src(%177 : memref<8x128xf32, #tpu.memory_space<any>>) dst(%179 : memref<8x128xf32, #tpu.memory_space<vmem>>)
    %c1_i32_89 = arith.constant 1 : i32
    %182 = arith.addi %c4_i32, %c1_i32_89 : i32
    %c8_i32_90 = arith.constant 8 : i32
    %183 = arith.cmpi slt, %182, %c8_i32_90 : i32
    %184 = arith.extui %183 : i1 to i32
    %c0_i32_91 = arith.constant 0 : i32
    %185 = arith.cmpi ne, %184, %c0_i32_91 : i32
    scf.if %185 {
      %c1_i32_150 = arith.constant 1 : i32
      %328 = arith.addi %c4_i32, %c1_i32_150 : i32
      %c1_i32_151 = arith.constant 1 : i32
      %329 = arith.subi %c1_i32_151, %175 : i32
      %c0_i32_152 = arith.constant 0 : i32
      %c0_i32_153 = arith.constant 0 : i32
      %330 = tpu.memref_slice %arg9[%328, %c0_i32_152, %c0_i32_153] : memref<8x8x128xf32, #tpu.memory_space<any>> -> memref<1x8x128xf32, #tpu.memory_space<any>>
      %331 = tpu.memref_squeeze %330 : memref<1x8x128xf32, #tpu.memory_space<any>> -> memref<8x128xf32, #tpu.memory_space<any>>
      %c0_i32_154 = arith.constant 0 : i32
      %c0_i32_155 = arith.constant 0 : i32
      %332 = tpu.memref_slice %arg11[%329, %c0_i32_154, %c0_i32_155] : memref<2x8x128xf32, #tpu.memory_space<vmem>> -> memref<1x8x128xf32, #tpu.memory_space<vmem>>
      %333 = tpu.memref_squeeze %332 : memref<1x8x128xf32, #tpu.memory_space<vmem>> -> memref<8x128xf32, #tpu.memory_space<vmem>>
      %334 = tpu.memref_slice %arg12[%329] : memref<2x!tpu.dma_semaphore, #tpu.memory_space<semaphore_mem>> -> memref<1x!tpu.dma_semaphore, #tpu.memory_space<semaphore_mem>>
      %335 = tpu.memref_squeeze %334 : memref<1x!tpu.dma_semaphore, #tpu.memory_space<semaphore_mem>> -> memref<!tpu.dma_semaphore, #tpu.memory_space<semaphore_mem>>
      tpu.enqueue_dma source(%331 : memref<8x128xf32, #tpu.memory_space<any>>) target(%333 : memref<8x128xf32, #tpu.memory_space<vmem>>) target_semaphore(%335 : memref<!tpu.dma_semaphore, #tpu.memory_space<semaphore_mem>>)
    } else {
    }
    %c0_92 = arith.constant 0 : index
    %186 = arith.index_cast %c4_i32 : i32 to index
    %187 = memref.load %arg0[%c0_92, %186] : memref<4x8xf32, #tpu.memory_space<smem>>
    %c1_93 = arith.constant 1 : index
    %188 = arith.index_cast %c4_i32 : i32 to index
    %189 = memref.load %arg0[%c1_93, %188] : memref<4x8xf32, #tpu.memory_space<smem>>
    %c2_94 = arith.constant 2 : index
    %190 = arith.index_cast %c4_i32 : i32 to index
    %191 = memref.load %arg0[%c2_94, %190] : memref<4x8xf32, #tpu.memory_space<smem>>
    %c3_95 = arith.constant 3 : index
    %192 = arith.index_cast %c4_i32 : i32 to index
    %193 = memref.load %arg0[%c3_95, %192] : memref<4x8xf32, #tpu.memory_space<smem>>
    %194 = arith.truncf %174 : vector<8x128xf32> to vector<8x128xbf16>
    %cst_96 = arith.constant dense<0.000000e+00> : vector<8x128xf32>
    %195 = tpu.matmul %194, %20, %cst_96 {dimension_numbers = #tpu.dot_dimension_numbers<[1], [0], [0], [1], [0, 0, 1, 1], [], []>} : vector<8x128xbf16>, vector<128x128xbf16>, vector<8x128xf32> -> vector<8x128xf32>
    %196 = arith.addf %195, %19 : vector<8x128xf32>
    %197 = vector.broadcast %193 : f32 to vector<1x128xf32>
    %198 = arith.mulf %197, %21 : vector<1x128xf32>
    %199 = vector.broadcast %198 : vector<1x128xf32> to vector<8x128xf32>
    %200 = arith.addf %196, %199 : vector<8x128xf32>
    %201 = math.tanh %200 : vector<8x128xf32>
    %202 = vector.broadcast %187 : f32 to vector<8x128xf32>
    %203 = arith.mulf %202, %201 : vector<8x128xf32>
    %204 = vector.broadcast %189 : f32 to vector<8x128xf32>
    %205 = arith.mulf %204, %174 : vector<8x128xf32>
    %206 = arith.addf %203, %205 : vector<8x128xf32>
    %207 = arith.index_cast %175 : i32 to index
    %c0_97 = arith.constant 0 : index
    %c0_98 = arith.constant 0 : index
    %208 = vector.load %arg11[%207, %c0_97, %c0_98] : memref<2x8x128xf32, #tpu.memory_space<vmem>>, vector<1x8x128xf32>
    %209 = vector.shape_cast %208 : vector<1x8x128xf32> to vector<8x128xf32>
    %210 = vector.broadcast %191 : f32 to vector<8x128xf32>
    %211 = arith.mulf %209, %210 : vector<8x128xf32>
    %212 = arith.addf %206, %211 : vector<8x128xf32>
    %c5_i32 = arith.constant 5 : i32
    %c1_i32_99 = arith.constant 1 : i32
    %213 = arith.andi %c5_i32, %c1_i32_99 : i32
    %c0_i32_100 = arith.constant 0 : i32
    %c0_i32_101 = arith.constant 0 : i32
    %c0_i32_102 = arith.constant 0 : i32
    %214 = tpu.memref_slice %arg9[%c0_i32_100, %c0_i32_101, %c0_i32_102] : memref<8x8x128xf32, #tpu.memory_space<any>> -> memref<1x8x128xf32, #tpu.memory_space<any>>
    %215 = tpu.memref_squeeze %214 : memref<1x8x128xf32, #tpu.memory_space<any>> -> memref<8x128xf32, #tpu.memory_space<any>>
    %c0_i32_103 = arith.constant 0 : i32
    %c0_i32_104 = arith.constant 0 : i32
    %216 = tpu.memref_slice %arg11[%213, %c0_i32_103, %c0_i32_104] : memref<2x8x128xf32, #tpu.memory_space<vmem>> -> memref<1x8x128xf32, #tpu.memory_space<vmem>>
    %217 = tpu.memref_squeeze %216 : memref<1x8x128xf32, #tpu.memory_space<vmem>> -> memref<8x128xf32, #tpu.memory_space<vmem>>
    %218 = tpu.memref_slice %arg12[%213] : memref<2x!tpu.dma_semaphore, #tpu.memory_space<semaphore_mem>> -> memref<1x!tpu.dma_semaphore, #tpu.memory_space<semaphore_mem>>
    %219 = tpu.memref_squeeze %218 : memref<1x!tpu.dma_semaphore, #tpu.memory_space<semaphore_mem>> -> memref<!tpu.dma_semaphore, #tpu.memory_space<semaphore_mem>>
    tpu.wait_dma2 semaphore(%219 : memref<!tpu.dma_semaphore, #tpu.memory_space<semaphore_mem>>) src(%215 : memref<8x128xf32, #tpu.memory_space<any>>) dst(%217 : memref<8x128xf32, #tpu.memory_space<vmem>>)
    %c1_i32_105 = arith.constant 1 : i32
    %220 = arith.addi %c5_i32, %c1_i32_105 : i32
    %c8_i32_106 = arith.constant 8 : i32
    %221 = arith.cmpi slt, %220, %c8_i32_106 : i32
    %222 = arith.extui %221 : i1 to i32
    %c0_i32_107 = arith.constant 0 : i32
    %223 = arith.cmpi ne, %222, %c0_i32_107 : i32
    scf.if %223 {
      %c1_i32_150 = arith.constant 1 : i32
      %328 = arith.addi %c5_i32, %c1_i32_150 : i32
      %c1_i32_151 = arith.constant 1 : i32
      %329 = arith.subi %c1_i32_151, %213 : i32
      %c0_i32_152 = arith.constant 0 : i32
      %c0_i32_153 = arith.constant 0 : i32
      %330 = tpu.memref_slice %arg9[%328, %c0_i32_152, %c0_i32_153] : memref<8x8x128xf32, #tpu.memory_space<any>> -> memref<1x8x128xf32, #tpu.memory_space<any>>
      %331 = tpu.memref_squeeze %330 : memref<1x8x128xf32, #tpu.memory_space<any>> -> memref<8x128xf32, #tpu.memory_space<any>>
      %c0_i32_154 = arith.constant 0 : i32
      %c0_i32_155 = arith.constant 0 : i32
      %332 = tpu.memref_slice %arg11[%329, %c0_i32_154, %c0_i32_155] : memref<2x8x128xf32, #tpu.memory_space<vmem>> -> memref<1x8x128xf32, #tpu.memory_space<vmem>>
      %333 = tpu.memref_squeeze %332 : memref<1x8x128xf32, #tpu.memory_space<vmem>> -> memref<8x128xf32, #tpu.memory_space<vmem>>
      %334 = tpu.memref_slice %arg12[%329] : memref<2x!tpu.dma_semaphore, #tpu.memory_space<semaphore_mem>> -> memref<1x!tpu.dma_semaphore, #tpu.memory_space<semaphore_mem>>
      %335 = tpu.memref_squeeze %334 : memref<1x!tpu.dma_semaphore, #tpu.memory_space<semaphore_mem>> -> memref<!tpu.dma_semaphore, #tpu.memory_space<semaphore_mem>>
      tpu.enqueue_dma source(%331 : memref<8x128xf32, #tpu.memory_space<any>>) target(%333 : memref<8x128xf32, #tpu.memory_space<vmem>>) target_semaphore(%335 : memref<!tpu.dma_semaphore, #tpu.memory_space<semaphore_mem>>)
    } else {
    }
    %c0_108 = arith.constant 0 : index
    %224 = arith.index_cast %c5_i32 : i32 to index
    %225 = memref.load %arg0[%c0_108, %224] : memref<4x8xf32, #tpu.memory_space<smem>>
    %c1_109 = arith.constant 1 : index
    %226 = arith.index_cast %c5_i32 : i32 to index
    %227 = memref.load %arg0[%c1_109, %226] : memref<4x8xf32, #tpu.memory_space<smem>>
    %c2_110 = arith.constant 2 : index
    %228 = arith.index_cast %c5_i32 : i32 to index
    %229 = memref.load %arg0[%c2_110, %228] : memref<4x8xf32, #tpu.memory_space<smem>>
    %c3_111 = arith.constant 3 : index
    %230 = arith.index_cast %c5_i32 : i32 to index
    %231 = memref.load %arg0[%c3_111, %230] : memref<4x8xf32, #tpu.memory_space<smem>>
    %232 = arith.truncf %212 : vector<8x128xf32> to vector<8x128xbf16>
    %cst_112 = arith.constant dense<0.000000e+00> : vector<8x128xf32>
    %233 = tpu.matmul %232, %20, %cst_112 {dimension_numbers = #tpu.dot_dimension_numbers<[1], [0], [0], [1], [0, 0, 1, 1], [], []>} : vector<8x128xbf16>, vector<128x128xbf16>, vector<8x128xf32> -> vector<8x128xf32>
    %234 = arith.addf %233, %19 : vector<8x128xf32>
    %235 = vector.broadcast %231 : f32 to vector<1x128xf32>
    %236 = arith.mulf %235, %21 : vector<1x128xf32>
    %237 = vector.broadcast %236 : vector<1x128xf32> to vector<8x128xf32>
    %238 = arith.addf %234, %237 : vector<8x128xf32>
    %239 = math.tanh %238 : vector<8x128xf32>
    %240 = vector.broadcast %225 : f32 to vector<8x128xf32>
    %241 = arith.mulf %240, %239 : vector<8x128xf32>
    %242 = vector.broadcast %227 : f32 to vector<8x128xf32>
    %243 = arith.mulf %242, %212 : vector<8x128xf32>
    %244 = arith.addf %241, %243 : vector<8x128xf32>
    %245 = arith.index_cast %213 : i32 to index
    %c0_113 = arith.constant 0 : index
    %c0_114 = arith.constant 0 : index
    %246 = vector.load %arg11[%245, %c0_113, %c0_114] : memref<2x8x128xf32, #tpu.memory_space<vmem>>, vector<1x8x128xf32>
    %247 = vector.shape_cast %246 : vector<1x8x128xf32> to vector<8x128xf32>
    %248 = vector.broadcast %229 : f32 to vector<8x128xf32>
    %249 = arith.mulf %247, %248 : vector<8x128xf32>
    %250 = arith.addf %244, %249 : vector<8x128xf32>
    %c6_i32 = arith.constant 6 : i32
    %c1_i32_115 = arith.constant 1 : i32
    %251 = arith.andi %c6_i32, %c1_i32_115 : i32
    %c0_i32_116 = arith.constant 0 : i32
    %c0_i32_117 = arith.constant 0 : i32
    %c0_i32_118 = arith.constant 0 : i32
    %252 = tpu.memref_slice %arg9[%c0_i32_116, %c0_i32_117, %c0_i32_118] : memref<8x8x128xf32, #tpu.memory_space<any>> -> memref<1x8x128xf32, #tpu.memory_space<any>>
    %253 = tpu.memref_squeeze %252 : memref<1x8x128xf32, #tpu.memory_space<any>> -> memref<8x128xf32, #tpu.memory_space<any>>
    %c0_i32_119 = arith.constant 0 : i32
    %c0_i32_120 = arith.constant 0 : i32
    %254 = tpu.memref_slice %arg11[%251, %c0_i32_119, %c0_i32_120] : memref<2x8x128xf32, #tpu.memory_space<vmem>> -> memref<1x8x128xf32, #tpu.memory_space<vmem>>
    %255 = tpu.memref_squeeze %254 : memref<1x8x128xf32, #tpu.memory_space<vmem>> -> memref<8x128xf32, #tpu.memory_space<vmem>>
    %256 = tpu.memref_slice %arg12[%251] : memref<2x!tpu.dma_semaphore, #tpu.memory_space<semaphore_mem>> -> memref<1x!tpu.dma_semaphore, #tpu.memory_space<semaphore_mem>>
    %257 = tpu.memref_squeeze %256 : memref<1x!tpu.dma_semaphore, #tpu.memory_space<semaphore_mem>> -> memref<!tpu.dma_semaphore, #tpu.memory_space<semaphore_mem>>
    tpu.wait_dma2 semaphore(%257 : memref<!tpu.dma_semaphore, #tpu.memory_space<semaphore_mem>>) src(%253 : memref<8x128xf32, #tpu.memory_space<any>>) dst(%255 : memref<8x128xf32, #tpu.memory_space<vmem>>)
    %c1_i32_121 = arith.constant 1 : i32
    %258 = arith.addi %c6_i32, %c1_i32_121 : i32
    %c8_i32_122 = arith.constant 8 : i32
    %259 = arith.cmpi slt, %258, %c8_i32_122 : i32
    %260 = arith.extui %259 : i1 to i32
    %c0_i32_123 = arith.constant 0 : i32
    %261 = arith.cmpi ne, %260, %c0_i32_123 : i32
    scf.if %261 {
      %c1_i32_150 = arith.constant 1 : i32
      %328 = arith.addi %c6_i32, %c1_i32_150 : i32
      %c1_i32_151 = arith.constant 1 : i32
      %329 = arith.subi %c1_i32_151, %251 : i32
      %c0_i32_152 = arith.constant 0 : i32
      %c0_i32_153 = arith.constant 0 : i32
      %330 = tpu.memref_slice %arg9[%328, %c0_i32_152, %c0_i32_153] : memref<8x8x128xf32, #tpu.memory_space<any>> -> memref<1x8x128xf32, #tpu.memory_space<any>>
      %331 = tpu.memref_squeeze %330 : memref<1x8x128xf32, #tpu.memory_space<any>> -> memref<8x128xf32, #tpu.memory_space<any>>
      %c0_i32_154 = arith.constant 0 : i32
      %c0_i32_155 = arith.constant 0 : i32
      %332 = tpu.memref_slice %arg11[%329, %c0_i32_154, %c0_i32_155] : memref<2x8x128xf32, #tpu.memory_space<vmem>> -> memref<1x8x128xf32, #tpu.memory_space<vmem>>
      %333 = tpu.memref_squeeze %332 : memref<1x8x128xf32, #tpu.memory_space<vmem>> -> memref<8x128xf32, #tpu.memory_space<vmem>>
      %334 = tpu.memref_slice %arg12[%329] : memref<2x!tpu.dma_semaphore, #tpu.memory_space<semaphore_mem>> -> memref<1x!tpu.dma_semaphore, #tpu.memory_space<semaphore_mem>>
      %335 = tpu.memref_squeeze %334 : memref<1x!tpu.dma_semaphore, #tpu.memory_space<semaphore_mem>> -> memref<!tpu.dma_semaphore, #tpu.memory_space<semaphore_mem>>
      tpu.enqueue_dma source(%331 : memref<8x128xf32, #tpu.memory_space<any>>) target(%333 : memref<8x128xf32, #tpu.memory_space<vmem>>) target_semaphore(%335 : memref<!tpu.dma_semaphore, #tpu.memory_space<semaphore_mem>>)
    } else {
    }
    %c0_124 = arith.constant 0 : index
    %262 = arith.index_cast %c6_i32 : i32 to index
    %263 = memref.load %arg0[%c0_124, %262] : memref<4x8xf32, #tpu.memory_space<smem>>
    %c1_125 = arith.constant 1 : index
    %264 = arith.index_cast %c6_i32 : i32 to index
    %265 = memref.load %arg0[%c1_125, %264] : memref<4x8xf32, #tpu.memory_space<smem>>
    %c2_126 = arith.constant 2 : index
    %266 = arith.index_cast %c6_i32 : i32 to index
    %267 = memref.load %arg0[%c2_126, %266] : memref<4x8xf32, #tpu.memory_space<smem>>
    %c3_127 = arith.constant 3 : index
    %268 = arith.index_cast %c6_i32 : i32 to index
    %269 = memref.load %arg0[%c3_127, %268] : memref<4x8xf32, #tpu.memory_space<smem>>
    %270 = arith.truncf %250 : vector<8x128xf32> to vector<8x128xbf16>
    %cst_128 = arith.constant dense<0.000000e+00> : vector<8x128xf32>
    %271 = tpu.matmul %270, %20, %cst_128 {dimension_numbers = #tpu.dot_dimension_numbers<[1], [0], [0], [1], [0, 0, 1, 1], [], []>} : vector<8x128xbf16>, vector<128x128xbf16>, vector<8x128xf32> -> vector<8x128xf32>
    %272 = arith.addf %271, %19 : vector<8x128xf32>
    %273 = vector.broadcast %269 : f32 to vector<1x128xf32>
    %274 = arith.mulf %273, %21 : vector<1x128xf32>
    %275 = vector.broadcast %274 : vector<1x128xf32> to vector<8x128xf32>
    %276 = arith.addf %272, %275 : vector<8x128xf32>
    %277 = math.tanh %276 : vector<8x128xf32>
    %278 = vector.broadcast %263 : f32 to vector<8x128xf32>
    %279 = arith.mulf %278, %277 : vector<8x128xf32>
    %280 = vector.broadcast %265 : f32 to vector<8x128xf32>
    %281 = arith.mulf %280, %250 : vector<8x128xf32>
    %282 = arith.addf %279, %281 : vector<8x128xf32>
    %283 = arith.index_cast %251 : i32 to index
    %c0_129 = arith.constant 0 : index
    %c0_130 = arith.constant 0 : index
    %284 = vector.load %arg11[%283, %c0_129, %c0_130] : memref<2x8x128xf32, #tpu.memory_space<vmem>>, vector<1x8x128xf32>
    %285 = vector.shape_cast %284 : vector<1x8x128xf32> to vector<8x128xf32>
    %286 = vector.broadcast %267 : f32 to vector<8x128xf32>
    %287 = arith.mulf %285, %286 : vector<8x128xf32>
    %288 = arith.addf %282, %287 : vector<8x128xf32>
    %c7_i32 = arith.constant 7 : i32
    %c1_i32_131 = arith.constant 1 : i32
    %289 = arith.andi %c7_i32, %c1_i32_131 : i32
    %c0_i32_132 = arith.constant 0 : i32
    %c0_i32_133 = arith.constant 0 : i32
    %c0_i32_134 = arith.constant 0 : i32
    %290 = tpu.memref_slice %arg9[%c0_i32_132, %c0_i32_133, %c0_i32_134] : memref<8x8x128xf32, #tpu.memory_space<any>> -> memref<1x8x128xf32, #tpu.memory_space<any>>
    %291 = tpu.memref_squeeze %290 : memref<1x8x128xf32, #tpu.memory_space<any>> -> memref<8x128xf32, #tpu.memory_space<any>>
    %c0_i32_135 = arith.constant 0 : i32
    %c0_i32_136 = arith.constant 0 : i32
    %292 = tpu.memref_slice %arg11[%289, %c0_i32_135, %c0_i32_136] : memref<2x8x128xf32, #tpu.memory_space<vmem>> -> memref<1x8x128xf32, #tpu.memory_space<vmem>>
    %293 = tpu.memref_squeeze %292 : memref<1x8x128xf32, #tpu.memory_space<vmem>> -> memref<8x128xf32, #tpu.memory_space<vmem>>
    %294 = tpu.memref_slice %arg12[%289] : memref<2x!tpu.dma_semaphore, #tpu.memory_space<semaphore_mem>> -> memref<1x!tpu.dma_semaphore, #tpu.memory_space<semaphore_mem>>
    %295 = tpu.memref_squeeze %294 : memref<1x!tpu.dma_semaphore, #tpu.memory_space<semaphore_mem>> -> memref<!tpu.dma_semaphore, #tpu.memory_space<semaphore_mem>>
    tpu.wait_dma2 semaphore(%295 : memref<!tpu.dma_semaphore, #tpu.memory_space<semaphore_mem>>) src(%291 : memref<8x128xf32, #tpu.memory_space<any>>) dst(%293 : memref<8x128xf32, #tpu.memory_space<vmem>>)
    %c1_i32_137 = arith.constant 1 : i32
    %296 = arith.addi %c7_i32, %c1_i32_137 : i32
    %c8_i32_138 = arith.constant 8 : i32
    %297 = arith.cmpi slt, %296, %c8_i32_138 : i32
    %298 = arith.extui %297 : i1 to i32
    %c0_i32_139 = arith.constant 0 : i32
    %299 = arith.cmpi ne, %298, %c0_i32_139 : i32
    scf.if %299 {
      %c1_i32_150 = arith.constant 1 : i32
      %328 = arith.addi %c7_i32, %c1_i32_150 : i32
      %c1_i32_151 = arith.constant 1 : i32
      %329 = arith.subi %c1_i32_151, %289 : i32
      %c0_i32_152 = arith.constant 0 : i32
      %c0_i32_153 = arith.constant 0 : i32
      %330 = tpu.memref_slice %arg9[%328, %c0_i32_152, %c0_i32_153] : memref<8x8x128xf32, #tpu.memory_space<any>> -> memref<1x8x128xf32, #tpu.memory_space<any>>
      %331 = tpu.memref_squeeze %330 : memref<1x8x128xf32, #tpu.memory_space<any>> -> memref<8x128xf32, #tpu.memory_space<any>>
      %c0_i32_154 = arith.constant 0 : i32
      %c0_i32_155 = arith.constant 0 : i32
      %332 = tpu.memref_slice %arg11[%329, %c0_i32_154, %c0_i32_155] : memref<2x8x128xf32, #tpu.memory_space<vmem>> -> memref<1x8x128xf32, #tpu.memory_space<vmem>>
      %333 = tpu.memref_squeeze %332 : memref<1x8x128xf32, #tpu.memory_space<vmem>> -> memref<8x128xf32, #tpu.memory_space<vmem>>
      %334 = tpu.memref_slice %arg12[%329] : memref<2x!tpu.dma_semaphore, #tpu.memory_space<semaphore_mem>> -> memref<1x!tpu.dma_semaphore, #tpu.memory_space<semaphore_mem>>
      %335 = tpu.memref_squeeze %334 : memref<1x!tpu.dma_semaphore, #tpu.memory_space<semaphore_mem>> -> memref<!tpu.dma_semaphore, #tpu.memory_space<semaphore_mem>>
      tpu.enqueue_dma source(%331 : memref<8x128xf32, #tpu.memory_space<any>>) target(%333 : memref<8x128xf32, #tpu.memory_space<vmem>>) target_semaphore(%335 : memref<!tpu.dma_semaphore, #tpu.memory_space<semaphore_mem>>)
    } else {
    }
    %c0_140 = arith.constant 0 : index
    %300 = arith.index_cast %c7_i32 : i32 to index
    %301 = memref.load %arg0[%c0_140, %300] : memref<4x8xf32, #tpu.memory_space<smem>>
    %c1_141 = arith.constant 1 : index
    %302 = arith.index_cast %c7_i32 : i32 to index
    %303 = memref.load %arg0[%c1_141, %302] : memref<4x8xf32, #tpu.memory_space<smem>>
    %c2_142 = arith.constant 2 : index
    %304 = arith.index_cast %c7_i32 : i32 to index
    %305 = memref.load %arg0[%c2_142, %304] : memref<4x8xf32, #tpu.memory_space<smem>>
    %c3_143 = arith.constant 3 : index
    %306 = arith.index_cast %c7_i32 : i32 to index
    %307 = memref.load %arg0[%c3_143, %306] : memref<4x8xf32, #tpu.memory_space<smem>>
    %308 = arith.truncf %288 : vector<8x128xf32> to vector<8x128xbf16>
    %cst_144 = arith.constant dense<0.000000e+00> : vector<8x128xf32>
    %309 = tpu.matmul %308, %20, %cst_144 {dimension_numbers = #tpu.dot_dimension_numbers<[1], [0], [0], [1], [0, 0, 1, 1], [], []>} : vector<8x128xbf16>, vector<128x128xbf16>, vector<8x128xf32> -> vector<8x128xf32>
    %310 = arith.addf %309, %19 : vector<8x128xf32>
    %311 = vector.broadcast %307 : f32 to vector<1x128xf32>
    %312 = arith.mulf %311, %21 : vector<1x128xf32>
    %313 = vector.broadcast %312 : vector<1x128xf32> to vector<8x128xf32>
    %314 = arith.addf %310, %313 : vector<8x128xf32>
    %315 = math.tanh %314 : vector<8x128xf32>
    %316 = vector.broadcast %301 : f32 to vector<8x128xf32>
    %317 = arith.mulf %316, %315 : vector<8x128xf32>
    %318 = vector.broadcast %303 : f32 to vector<8x128xf32>
    %319 = arith.mulf %318, %288 : vector<8x128xf32>
    %320 = arith.addf %317, %319 : vector<8x128xf32>
    %321 = arith.index_cast %289 : i32 to index
    %c0_145 = arith.constant 0 : index
    %c0_146 = arith.constant 0 : index
    %322 = vector.load %arg11[%321, %c0_145, %c0_146] : memref<2x8x128xf32, #tpu.memory_space<vmem>>, vector<1x8x128xf32>
    %323 = vector.shape_cast %322 : vector<1x8x128xf32> to vector<8x128xf32>
    %324 = vector.broadcast %305 : f32 to vector<8x128xf32>
    %325 = arith.mulf %323, %324 : vector<8x128xf32>
    %326 = arith.addf %320, %325 : vector<8x128xf32>
    %c8_i32_147 = arith.constant 8 : i32
    %c0_148 = arith.constant 0 : index
    %c0_149 = arith.constant 0 : index
    %327 = vector.load %arg10[%c0_148, %c0_149] : memref<8x128xf32, #tpu.memory_space<vmem>>, vector<8x128xf32>
    tpu.vector_store %arg10[%c0_148, %c0_149], %326 {strides = array<i32>} : memref<8x128xf32, #tpu.memory_space<vmem>>, vector<8x128xf32>,
    return
  }
}

</mosaic_0001>

<llo_original>
// kernel: tpu_custom_call.1
$region0: #{tpu_custom_call.1}
  #allocation0 [shape = 'u32[]', space=smem, size = 0x4, offset = 0x4, fixed_abs, tag = 'smem constant byte address 0x4 - core index']
  #allocation1 [shape = 'u32[72,128]{1,0:T(1,128)}', space=vmem, size = 0x9000, scoped, tag = 'internal scratch']
  #allocation2 [shape = 'f32[2,8,128]{2,1,0:T(8,128)}', space=vmem, size = 0x2000, scoped, tag = 'scratch operand']
  #allocation3 [shape = 's32[2]{0}', space=sflag, size = 0x8, scoped, tag = 'scratch operand']
  #allocation16 [shape = 's32[]', space=sflag, size = 0x4, offset = 0, fixed_abs, tag = 'sflag constant byte address 0x0 - dummy sync flag']
  #allocation17 [shape = 's32[]', space=sflag, size = 0x4, offset = 0, fixed_abs, tag = 'sflag constant byte address 0x0 - dummy sync flag']
  #allocation18 [shape = 'u32[]', space=smem, size = 0x4, offset = 0x44, fixed_abs, tag = 'smem constant byte address 0x44 - assertion arg 0']
  #allocation19 [shape = 'u32[]', space=smem, size = 0x4, offset = 0x48, fixed_abs, tag = 'smem constant byte address 0x48 - assertion arg 1']
  #allocation20 [shape = 's32[]', space=sflag, size = 0x4, offset = 0, fixed_abs, tag = 'sflag constant byte address 0x0 - dummy sync flag']
  #allocation21 [shape = 's32[]', space=sflag, size = 0x4, offset = 0, fixed_abs, tag = 'sflag constant byte address 0x0 - dummy sync flag']
  #allocation22 [shape = 's32[]', space=sflag, size = 0x4, offset = 0, fixed_abs, tag = 'sflag constant byte address 0x0 - dummy sync flag']
  #allocation23 [shape = 's32[]', space=sflag, size = 0x4, offset = 0, fixed_abs, tag = 'sflag constant byte address 0x0 - dummy sync flag']
  #allocation24 [shape = 's32[]', space=sflag, size = 0x4, offset = 0, fixed_abs, tag = 'sflag constant byte address 0x0 - dummy sync flag']
  #allocation25 [shape = 's32[]', space=sflag, size = 0x4, offset = 0, fixed_abs, tag = 'sflag constant byte address 0x0 - dummy sync flag']
  #allocation26 [shape = 's32[]', space=sflag, size = 0x4, offset = 0, fixed_abs, tag = 'sflag constant byte address 0x0 - dummy sync flag']
  #allocation27 [shape = 's32[]', space=sflag, size = 0x4, offset = 0, fixed_abs, tag = 'sflag constant byte address 0x0 - dummy sync flag']
  #allocation28 [shape = 's32[]', space=sflag, size = 0x4, offset = 0, fixed_abs, tag = 'sflag constant byte address 0x0 - dummy sync flag']
  #allocation29 [shape = 's32[]', space=sflag, size = 0x4, offset = 0, fixed_abs, tag = 'sflag constant byte address 0x0 - dummy sync flag']
  #allocation30 [shape = 's32[]', space=sflag, size = 0x4, offset = 0, fixed_abs, tag = 'sflag constant byte address 0x0 - dummy sync flag']
  #allocation31 [shape = 's32[]', space=sflag, size = 0x4, offset = 0, fixed_abs, tag = 'sflag constant byte address 0x0 - dummy sync flag']
  #allocation32 [shape = 's32[]', space=sflag, size = 0x4, offset = 0, fixed_abs, tag = 'sflag constant byte address 0x0 - dummy sync flag']
  #allocation33 [shape = 's32[]', space=sflag, size = 0x4, offset = 0, fixed_abs, tag = 'sflag constant byte address 0x0 - dummy sync flag']
  %s0 = inlined_call_operand.hbm [shape: f32[4,8], index: 0, kind: input, shape index: {}]
  %s1 = inlined_call_operand.hbm [shape: f32[8,1024], index: 1, kind: input, shape index: {}]
  %s2 = inlined_call_operand.hbm [shape: bf16[1024,128], index: 2, kind: input, shape index: {}]
  %s3 = inlined_call_operand.vmem [shape: f32[1,128], index: 3, kind: input, shape index: {}]
  %s4 = inlined_call_operand.hbm [shape: bf16[128,128], index: 4, kind: input, shape index: {}]
  %s5 = inlined_call_operand.hbm [shape: bf16[128,128], index: 5, kind: input, shape index: {}]
  %s6 = inlined_call_operand.vmem [shape: f32[1,128], index: 6, kind: input, shape index: {}]
  %s7 = inlined_call_operand.vmem [shape: f32[1,128], index: 7, kind: input, shape index: {}]
  %s8 = inlined_call_operand.hbm [shape: f32[8,128], index: 8, kind: input, shape index: {}]
  %s9 = inlined_call_operand.hbm [shape: f32[8,8,128], index: 9, kind: input, shape index: {}]
  %s10 = inlined_call_operand.hbm [shape: f32[8,128], index: 10, kind: output, shape index: {}]
  %s11 = sld [smem:[#allocation0]]
  $region102: #{tpu_custom_call.1} parent=0
    _
  %s13 = ssub.s32 1, %s11
  %s14 = scalar_select 0, %s13, %s11
  $region1: #{tpu_custom_call.1} parent=0
    #allocation4 [shape = 'u8[2048]{0}', space=smem, size = 0x800, scoped, tag = 'input window, operand 0, single buffered']
    #allocation5 [shape = 's32[1]{0}', space=sflag, size = 0x4, scoped, tag = 'scoped memory for tpu_custom_call.1']
    #allocation6 [shape = 's32[1]{0}', space=sflag, size = 0x4, scoped, tag = 'scoped memory for tpu_custom_call.1']
    #allocation7 [shape = 's32[1]{0}', space=sflag, size = 0x4, scoped, tag = 'scoped memory for tpu_custom_call.1']
    #allocation8 [shape = 'u8[32768]{0}', space=vmem, size = 0x8000, scoped, tag = 'input window, operand 1, single buffered']
    #allocation9 [shape = 'u8[262144]{0}', space=vmem, size = 0x40000, scoped, tag = 'input window, operand 2, single buffered']
    #allocation10 [shape = 's32[1]{0}', space=sflag, size = 0x4, scoped, tag = 'scoped memory for tpu_custom_call.1']
    #allocation11 [shape = 'u8[32768]{0}', space=vmem, size = 0x8000, scoped, tag = 'input window, operand 4, single buffered']
    #allocation12 [shape = 'u8[32768]{0}', space=vmem, size = 0x8000, scoped, tag = 'input window, operand 5, single buffered']
    #allocation13 [shape = 's32[1]{0}', space=sflag, size = 0x4, scoped, tag = 'scoped memory for tpu_custom_call.1']
    #allocation14 [shape = 'u8[4096]{0}', space=vmem, size = 0x1000, scoped, tag = 'input window, operand 8, single buffered']
    #allocation15 [shape = 'u8[4096]{0}', space=vmem, size = 0x1000, scoped, tag = 'output window, operand 0, single buffered']
    %15 = vsyncpa [#allocation7], 0
    %16 = vsyncpa [#allocation5], 0
    %17 = vsyncpa [#allocation10], 0
    %18 = vsyncpa [#allocation13], 0
    %19 = vsyncpa [#allocation6], 0
    // Predicated region
    $region2: #{tpu_custom_call.1} parent=1 // pred_check
      _
    $region3: #{tpu_custom_call.1} parent=1 // pred_check_branch
      %21 = sbr.rel (0) target = $region5
    $region4: #{tpu_custom_call.1} parent=1 // pred_region
      %23 = vsyncadd [#allocation7], 0
      %s25 = sshll.u32 %s0, 4
      %s26 = int_to_ptr.hbm [resolvable:$true] %s25
      %28 = dma.hbm_to_smem %s26, 64, [#allocation4], [#allocation7]
    $region5: #{tpu_custom_call.1} parent=1 // pred_fallthru
      _
    // Predicated region
    $region6: #{tpu_custom_call.1} parent=1 // pred_check
      _
    $region7: #{tpu_custom_call.1} parent=1 // pred_check_branch
      %30 = sbr.rel (0) target = $region9
    $region8: #{tpu_custom_call.1} parent=1 // pred_region
      %32 = vsyncadd [#allocation5], 0
      %s34 = sshll.u32 %s1, 4
      %s35 = int_to_ptr.hbm [resolvable:$true] %s34
      %s36 = sshll.u32 [#allocation8], 4
      %s37 = int_to_ptr.vmem [resolvable:$true] %s36
      %39 = dma.hbm_to_vmem [thread:$0]  %s35, 1024, %s37, [#allocation5]
    $region9: #{tpu_custom_call.1} parent=1 // pred_fallthru
      _
    // Predicated region
    $region10: #{tpu_custom_call.1} parent=1 // pred_check
      _
    $region11: #{tpu_custom_call.1} parent=1 // pred_check_branch
      %41 = sbr.rel (0) target = $region13
    $region12: #{tpu_custom_call.1} parent=1 // pred_region
      %43 = vsyncadd [#allocation10], 0
      %s44 = sshll.u32 %s2, 4
      %s45 = int_to_ptr.hbm [resolvable:$true] %s44
      %s46 = sshll.u32 [#allocation9], 4
      %s47 = int_to_ptr.vmem [resolvable:$true] %s46
      %52 = dma.hbm_to_vmem [thread:$0]  %s45, 8192, %s47, [#allocation10], 64, 64, 4
    $region13: #{tpu_custom_call.1} parent=1 // pred_fallthru
      _
    // Predicated region
    $region14: #{tpu_custom_call.1} parent=1 // pred_check
      _
    $region15: #{tpu_custom_call.1} parent=1 // pred_check_branch
      %54 = sbr.rel (0) target = $region17
    $region16: #{tpu_custom_call.1} parent=1 // pred_region
      _
    $region17: #{tpu_custom_call.1} parent=1 // pred_fallthru
      _
    // Predicated region
    $region18: #{tpu_custom_call.1} parent=1 // pred_check
      _
    $region19: #{tpu_custom_call.1} parent=1 // pred_check_branch
      %56 = sbr.rel (0) target = $region21
    $region20: #{tpu_custom_call.1} parent=1 // pred_region
      %58 = vsyncadd [#allocation10], 0
      %s59 = sshll.u32 %s4, 4
      %s60 = int_to_ptr.hbm [resolvable:$true] %s59
      %s61 = sshll.u32 [#allocation11], 4
      %s62 = int_to_ptr.vmem [resolvable:$true] %s61
      %67 = dma.hbm_to_vmem [thread:$0]  %s60, 1024, %s62, [#allocation10], 64, 64, 4
    $region21: #{tpu_custom_call.1} parent=1 // pred_fallthru
      _
    // Predicated region
    $region22: #{tpu_custom_call.1} parent=1 // pred_check
      _
    $region23: #{tpu_custom_call.1} parent=1 // pred_check_branch
      %69 = sbr.rel (0) target = $region25
    $region24: #{tpu_custom_call.1} parent=1 // pred_region
      %71 = vsyncadd [#allocation13], 0
      %s72 = sshll.u32 %s5, 4
      %s73 = int_to_ptr.hbm [resolvable:$true] %s72
      %s74 = sshll.u32 [#allocation12], 4
      %s75 = int_to_ptr.vmem [resolvable:$true] %s74
      %80 = dma.hbm_to_vmem [thread:$0]  %s73, 1024, %s75, [#allocation13], 64, 64, 4
    $region25: #{tpu_custom_call.1} parent=1 // pred_fallthru
      _
    // Predicated region
    $region26: #{tpu_custom_call.1} parent=1 // pred_check
      _
    $region27: #{tpu_custom_call.1} parent=1 // pred_check_branch
      %82 = sbr.rel (0) target = $region29
    $region28: #{tpu_custom_call.1} parent=1 // pred_region
      _
    $region29: #{tpu_custom_call.1} parent=1 // pred_fallthru
      _
    // Predicated region
    $region30: #{tpu_custom_call.1} parent=1 // pred_check
      _
    $region31: #{tpu_custom_call.1} parent=1 // pred_check_branch
      %84 = sbr.rel (0) target = $region33
    $region32: #{tpu_custom_call.1} parent=1 // pred_region
      _
    $region33: #{tpu_custom_call.1} parent=1 // pred_fallthru
      _
    // Predicated region
    $region34: #{tpu_custom_call.1} parent=1 // pred_check
      _
    $region35: #{tpu_custom_call.1} parent=1 // pred_check_branch
      %86 = sbr.rel (0) target = $region37
    $region36: #{tpu_custom_call.1} parent=1 // pred_region
      %88 = vsyncadd [#allocation13], 0
      %s90 = sshll.u32 %s8, 4
      %s91 = int_to_ptr.hbm [resolvable:$true] %s90
      %s92 = sshll.u32 [#allocation14], 4
      %s93 = int_to_ptr.vmem [resolvable:$true] %s92
      %95 = dma.hbm_to_vmem [thread:$0]  %s91, 128, %s93, [#allocation13]
    $region37: #{tpu_custom_call.1} parent=1 // pred_fallthru
      _
    // Predicated region
    $region38: #{tpu_custom_call.1} parent=1 // pred_check
      _
    $region39: #{tpu_custom_call.1} parent=1 // pred_check_branch
      %97 = sbr.rel (0) target = $region41
    $region40: #{tpu_custom_call.1} parent=1 // pred_region
      %99 = dma.done [#allocation7], 64
    $region41: #{tpu_custom_call.1} parent=1 // pred_fallthru
      _
    // Predicated region
    $region42: #{tpu_custom_call.1} parent=1 // pred_check
      _
    $region43: #{tpu_custom_call.1} parent=1 // pred_check_branch
      %101 = sbr.rel (0) target = $region45
    $region44: #{tpu_custom_call.1} parent=1 // pred_region
      %103 = dma.done [#allocation5], 1024
    $region45: #{tpu_custom_call.1} parent=1 // pred_fallthru
      _
    // Predicated region
    $region46: #{tpu_custom_call.1} parent=1 // pred_check
      _
    $region47: #{tpu_custom_call.1} parent=1 // pred_check_branch
      %105 = sbr.rel (0) target = $region49
    $region48: #{tpu_custom_call.1} parent=1 // pred_region
      %107 = dma.done [#allocation10], 8192
    $region49: #{tpu_custom_call.1} parent=1 // pred_fallthru
      _
    // Predicated region
    $region50: #{tpu_custom_call.1} parent=1 // pred_check
      _
    $region51: #{tpu_custom_call.1} parent=1 // pred_check_branch
      %109 = sbr.rel (0) target = $region53
    $region52: #{tpu_custom_call.1} parent=1 // pred_region
      %111 = dma.done [#allocation10], 1024
    $region53: #{tpu_custom_call.1} parent=1 // pred_fallthru
      _
    // Predicated region
    $region54: #{tpu_custom_call.1} parent=1 // pred_check
      _
    $region55: #{tpu_custom_call.1} parent=1 // pred_check_branch
      %113 = sbr.rel (0) target = $region57
    $region56: #{tpu_custom_call.1} parent=1 // pred_region
      %115 = dma.done [#allocation13], 1024
    $region57: #{tpu_custom_call.1} parent=1 // pred_fallthru
      _
    // Predicated region
    $region58: #{tpu_custom_call.1} parent=1 // pred_check
      _
    $region59: #{tpu_custom_call.1} parent=1 // pred_check_branch
      %117 = sbr.rel (0) target = $region61
    $region60: #{tpu_custom_call.1} parent=1 // pred_region
      %119 = dma.done [#allocation13], 128
    $region61: #{tpu_custom_call.1} parent=1 // pred_fallthru
      _
    %120 = sfence
    // Predicated region
    $region62: #{tpu_custom_call.1} parent=1 // pred_check
      _
    $region63: #{tpu_custom_call.1} parent=1 // pred_check_branch
      %122 = sbr.rel target = $region65
    $region64: #{tpu_custom_call.1} parent=1 // pred_region
      %123 = sst [smem:[#allocation18]] [#allocation17]
      %124 = sst [smem:[#allocation19]] [#allocation16]
    $region65: #{tpu_custom_call.1} parent=1 // pred_fallthru
      _
    %126 = shalt.err (0)
    %s128 = sshll.u32 %s9, 4
    %s129 = int_to_ptr.hbm [resolvable:$true] %s128
    %s130 = sshll.u32 [#allocation2], 4
    %s131 = int_to_ptr.vmem [resolvable:$true] %s130
    %133 = dma.hbm_to_vmem [thread:$0]  %s129, 128, %s131, [#allocation3]
    %v134 = vld [vmem:[#allocation8] sm:$0xff]
    %v135 = vld [vmem:[#allocation8 + $0x8] sm:$0xff]
    %v136 = vld [vmem:[#allocation8 + $0x10] sm:$0xff]
    %v137 = vld [vmem:[#allocation8 + $0x18] sm:$0xff]
    %v138 = vld [vmem:[#allocation8 + $0x20] sm:$0xff]
    %v139 = vld [vmem:[#allocation8 + $0x28] sm:$0xff]
    %v140 = vld [vmem:[#allocation8 + $0x30] sm:$0xff]
    %v141 = vld [vmem:[#allocation8 + $0x38] sm:$0xff]
    %v142 = vpack.c.bf16 %v134, %v134
    %v143 = vpack.c.bf16 %v135, %v135
    %v144 = vpack.c.bf16 %v136, %v136
    %v145 = vpack.c.bf16 %v137, %v137
    %v146 = vpack.c.bf16 %v138, %v138
    %v147 = vpack.c.bf16 %v139, %v139
    %v148 = vpack.c.bf16 %v140, %v140
    %v149 = vpack.c.bf16 %v141, %v141
    %v150 = vld [vmem:[#allocation9] sm:$0xf]
    %v151 = vld [vmem:[#allocation9 + $0x4] sm:$0xf]
    %v152 = vld [vmem:[#allocation9 + $0x8] sm:$0xf]
    %v153 = vld [vmem:[#allocation9 + $0xc] sm:$0xf]
    %v154 = vld [vmem:[#allocation9 + $0x10] sm:$0xf]
    %v155 = vld [vmem:[#allocation9 + $0x14] sm:$0xf]
    %v156 = vld [vmem:[#allocation9 + $0x18] sm:$0xf]
    %v157 = vld [vmem:[#allocation9 + $0x1c] sm:$0xf]
    %v158 = vld [vmem:[#allocation9 + $0x20] sm:$0xf]
    %v159 = vld [vmem:[#allocation9 + $0x24] sm:$0xf]
    %v160 = vld [vmem:[#allocation9 + $0x28] sm:$0xf]
    %v161 = vld [vmem:[#allocation9 + $0x2c] sm:$0xf]
    %v162 = vld [vmem:[#allocation9 + $0x30] sm:$0xf]
    %v163 = vld [vmem:[#allocation9 + $0x34] sm:$0xf]
    %v164 = vld [vmem:[#allocation9 + $0x38] sm:$0xf]
    %v165 = vld [vmem:[#allocation9 + $0x3c] sm:$0xf]
    %v166 = vld [vmem:[#allocation9 + $0x40] sm:$0xf]
    %v167 = vld [vmem:[#allocation9 + $0x44] sm:$0xf]
    %v168 = vld [vmem:[#allocation9 + $0x48] sm:$0xf]
    %v169 = vld [vmem:[#allocation9 + $0x4c] sm:$0xf]
    %v170 = vld [vmem:[#allocation9 + $0x50] sm:$0xf]
    %v171 = vld [vmem:[#allocation9 + $0x54] sm:$0xf]
    %v172 = vld [vmem:[#allocation9 + $0x58] sm:$0xf]
    %v173 = vld [vmem:[#allocation9 + $0x5c] sm:$0xf]
    %v174 = vld [vmem:[#allocation9 + $0x60] sm:$0xf]
    %v175 = vld [vmem:[#allocation9 + $0x64] sm:$0xf]
    %v176 = vld [vmem:[#allocation9 + $0x68] sm:$0xf]
    %v177 = vld [vmem:[#allocation9 + $0x6c] sm:$0xf]
    %v178 = vld [vmem:[#allocation9 + $0x70] sm:$0xf]
    %v179 = vld [vmem:[#allocation9 + $0x74] sm:$0xf]
    %v180 = vld [vmem:[#allocation9 + $0x78] sm:$0xf]
    %v181 = vld [vmem:[#allocation9 + $0x7c] sm:$0xf]
    %v182 = vld [vmem:[#allocation9 + $0x80] sm:$0xf]
    %v183 = vld [vmem:[#allocation9 + $0x84] sm:$0xf]
    %v184 = vld [vmem:[#allocation9 + $0x88] sm:$0xf]
    %v185 = vld [vmem:[#allocation9 + $0x8c] sm:$0xf]
    %v186 = vld [vmem:[#allocation9 + $0x90] sm:$0xf]
    %v187 = vld [vmem:[#allocation9 + $0x94] sm:$0xf]
    %v188 = vld [vmem:[#allocation9 + $0x98] sm:$0xf]
    %v189 = vld [vmem:[#allocation9 + $0x9c] sm:$0xf]
    %v190 = vld [vmem:[#allocation9 + $0xa0] sm:$0xf]
    %v191 = vld [vmem:[#allocation9 + $0xa4] sm:$0xf]
    %v192 = vld [vmem:[#allocation9 + $0xa8] sm:$0xf]
    %v193 = vld [vmem:[#allocation9 + $0xac] sm:$0xf]
    %v194 = vld [vmem:[#allocation9 + $0xb0] sm:$0xf]
    %v195 = vld [vmem:[#allocation9 + $0xb4] sm:$0xf]
    %v196 = vld [vmem:[#allocation9 + $0xb8] sm:$0xf]
    %v197 = vld [vmem:[#allocation9 + $0xbc] sm:$0xf]
    %v198 = vld [vmem:[#allocation9 + $0xc0] sm:$0xf]
    %v199 = vld [vmem:[#allocation9 + $0xc4] sm:$0xf]
    %v200 = vld [vmem:[#allocation9 + $0xc8] sm:$0xf]
    %v201 = vld [vmem:[#allocation9 + $0xcc] sm:$0xf]
    %v202 = vld [vmem:[#allocation9 + $0xd0] sm:$0xf]
    %v203 = vld [vmem:[#allocation9 + $0xd4] sm:$0xf]
    %v204 = vld [vmem:[#allocation9 + $0xd8] sm:$0xf]
    %v205 = vld [vmem:[#allocation9 + $0xdc] sm:$0xf]
    %v206 = vld [vmem:[#allocation9 + $0xe0] sm:$0xf]
    %v207 = vld [vmem:[#allocation9 + $0xe4] sm:$0xf]
    %v208 = vld [vmem:[#allocation9 + $0xe8] sm:$0xf]
    %v209 = vld [vmem:[#allocation9 + $0xec] sm:$0xf]
    %v210 = vld [vmem:[#allocation9 + $0xf0] sm:$0xf]
    %v211 = vld [vmem:[#allocation9 + $0xf4] sm:$0xf]
    %v212 = vld [vmem:[#allocation9 + $0xf8] sm:$0xf]
    %v213 = vld [vmem:[#allocation9 + $0xfc] sm:$0xf]
    %v214 = vld [vmem:[#allocation9 + $0x100] sm:$0xf]
    %v215 = vld [vmem:[#allocation9 + $0x104] sm:$0xf]
    %v216 = vld [vmem:[#allocation9 + $0x108] sm:$0xf]
    %v217 = vld [vmem:[#allocation9 + $0x10c] sm:$0xf]
    %v218 = vld [vmem:[#allocation9 + $0x110] sm:$0xf]
    %v219 = vld [vmem:[#allocation9 + $0x114] sm:$0xf]
    %v220 = vld [vmem:[#allocation9 + $0x118] sm:$0xf]
    %v221 = vld [vmem:[#allocation9 + $0x11c] sm:$0xf]
    %v222 = vld [vmem:[#allocation9 + $0x120] sm:$0xf]
    %v223 = vld [vmem:[#allocation9 + $0x124] sm:$0xf]
    %v224 = vld [vmem:[#allocation9 + $0x128] sm:$0xf]
    %v225 = vld [vmem:[#allocation9 + $0x12c] sm:$0xf]
    %v226 = vld [vmem:[#allocation9 + $0x130] sm:$0xf]
    %v227 = vld [vmem:[#allocation9 + $0x134] sm:$0xf]
    %v228 = vld [vmem:[#allocation9 + $0x138] sm:$0xf]
    %v229 = vld [vmem:[#allocation9 + $0x13c] sm:$0xf]
    %v230 = vld [vmem:[#allocation9 + $0x140] sm:$0xf]
    %v231 = vld [vmem:[#allocation9 + $0x144] sm:$0xf]
    %v232 = vld [vmem:[#allocation9 + $0x148] sm:$0xf]
    %v233 = vld [vmem:[#allocation9 + $0x14c] sm:$0xf]
    %v234 = vld [vmem:[#allocation9 + $0x150] sm:$0xf]
    %v235 = vld [vmem:[#allocation9 + $0x154] sm:$0xf]
    %v236 = vld [vmem:[#allocation9 + $0x158] sm:$0xf]
    %v237 = vld [vmem:[#allocation9 + $0x15c] sm:$0xf]
    %v238 = vld [vmem:[#allocation9 + $0x160] sm:$0xf]
    %v239 = vld [vmem:[#allocation9 + $0x164] sm:$0xf]
    %v240 = vld [vmem:[#allocation9 + $0x168] sm:$0xf]
    %v241 = vld [vmem:[#allocation9 + $0x16c] sm:$0xf]
    %v242 = vld [vmem:[#allocation9 + $0x170] sm:$0xf]
    %v243 = vld [vmem:[#allocation9 + $0x174] sm:$0xf]
    %v244 = vld [vmem:[#allocation9 + $0x178] sm:$0xf]
    %v245 = vld [vmem:[#allocation9 + $0x17c] sm:$0xf]
    %v246 = vld [vmem:[#allocation9 + $0x180] sm:$0xf]
    %v247 = vld [vmem:[#allocation9 + $0x184] sm:$0xf]
    %v248 = vld [vmem:[#allocation9 + $0x188] sm:$0xf]
    %v249 = vld [vmem:[#allocation9 + $0x18c] sm:$0xf]
    %v250 = vld [vmem:[#allocation9 + $0x190] sm:$0xf]
    %v251 = vld [vmem:[#allocation9 + $0x194] sm:$0xf]
    %v252 = vld [vmem:[#allocation9 + $0x198] sm:$0xf]
    %v253 = vld [vmem:[#allocation9 + $0x19c] sm:$0xf]
    %v254 = vld [vmem:[#allocation9 + $0x1a0] sm:$0xf]
    %v255 = vld [vmem:[#allocation9 + $0x1a4] sm:$0xf]
    %v256 = vld [vmem:[#allocation9 + $0x1a8] sm:$0xf]
    %v257 = vld [vmem:[#allocation9 + $0x1ac] sm:$0xf]
    %v258 = vld [vmem:[#allocation9 + $0x1b0] sm:$0xf]
    %v259 = vld [vmem:[#allocation9 + $0x1b4] sm:$0xf]
    %v260 = vld [vmem:[#allocation9 + $0x1b8] sm:$0xf]
    %v261 = vld [vmem:[#allocation9 + $0x1bc] sm:$0xf]
    %v262 = vld [vmem:[#allocation9 + $0x1c0] sm:$0xf]
    %v263 = vld [vmem:[#allocation9 + $0x1c4] sm:$0xf]
    %v264 = vld [vmem:[#allocation9 + $0x1c8] sm:$0xf]
    %v265 = vld [vmem:[#allocation9 + $0x1cc] sm:$0xf]
    %v266 = vld [vmem:[#allocation9 + $0x1d0] sm:$0xf]
    %v267 = vld [vmem:[#allocation9 + $0x1d4] sm:$0xf]
    %v268 = vld [vmem:[#allocation9 + $0x1d8] sm:$0xf]
    %v269 = vld [vmem:[#allocation9 + $0x1dc] sm:$0xf]
    %v270 = vld [vmem:[#allocation9 + $0x1e0] sm:$0xf]
    %v271 = vld [vmem:[#allocation9 + $0x1e4] sm:$0xf]
    %v272 = vld [vmem:[#allocation9 + $0x1e8] sm:$0xf]
    %v273 = vld [vmem:[#allocation9 + $0x1ec] sm:$0xf]
    %v274 = vld [vmem:[#allocation9 + $0x1f0] sm:$0xf]
    %v275 = vld [vmem:[#allocation9 + $0x1f4] sm:$0xf]
    %v276 = vld [vmem:[#allocation9 + $0x1f8] sm:$0xf]
    %v277 = vld [vmem:[#allocation9 + $0x1fc] sm:$0xf]
    %v278 = vld [vmem:[%s3] sm:$0x1]
    %v280 = vperm.slane %v278, 0
    %v410 = vunpack.c.l.b16 %v150
    %v411 = vunpack.c.l.b16 %v151
    %v412 = vunpack.c.l.b16 %v152
    %v413 = vunpack.c.l.b16 %v153
    %v414 = vunpack.c.l.b16 %v154
    %v415 = vunpack.c.l.b16 %v155
    %v416 = vunpack.c.l.b16 %v156
    %v417 = vunpack.c.l.b16 %v157
    %v418 = vunpack.c.l.b16 %v158
    %v419 = vunpack.c.l.b16 %v159
    %v420 = vunpack.c.l.b16 %v160
    %v421 = vunpack.c.l.b16 %v161
    %v422 = vunpack.c.l.b16 %v162
    %v423 = vunpack.c.l.b16 %v163
    %v424 = vunpack.c.l.b16 %v164
    %v425 = vunpack.c.l.b16 %v165
    %v426 = vunpack.c.l.b16 %v166
    %v427 = vunpack.c.l.b16 %v167
    %v428 = vunpack.c.l.b16 %v168
    %v429 = vunpack.c.l.b16 %v169
    %v430 = vunpack.c.l.b16 %v170
    %v431 = vunpack.c.l.b16 %v171
    %v432 = vunpack.c.l.b16 %v172
    %v433 = vunpack.c.l.b16 %v173
    %v434 = vunpack.c.l.b16 %v174
    %v435 = vunpack.c.l.b16 %v175
    %v436 = vunpack.c.l.b16 %v176
    %v437 = vunpack.c.l.b16 %v177
    %v438 = vunpack.c.l.b16 %v178
    %v439 = vunpack.c.l.b16 %v179
    %v440 = vunpack.c.l.b16 %v180
    %v441 = vunpack.c.l.b16 %v181
    %v442 = vunpack.c.l.b16 %v182
    %v443 = vunpack.c.l.b16 %v183
    %v444 = vunpack.c.l.b16 %v184
    %v445 = vunpack.c.l.b16 %v185
    %v446 = vunpack.c.l.b16 %v186
    %v447 = vunpack.c.l.b16 %v187
    %v448 = vunpack.c.l.b16 %v188
    %v449 = vunpack.c.l.b16 %v189
    %v450 = vunpack.c.l.b16 %v190
    %v451 = vunpack.c.l.b16 %v191
    %v452 = vunpack.c.l.b16 %v192
    %v453 = vunpack.c.l.b16 %v193
    %v454 = vunpack.c.l.b16 %v194
    %v455 = vunpack.c.l.b16 %v195
    %v456 = vunpack.c.l.b16 %v196
    %v457 = vunpack.c.l.b16 %v197
    %v458 = vunpack.c.l.b16 %v198
    %v459 = vunpack.c.l.b16 %v199
    %v460 = vunpack.c.l.b16 %v200
    %v461 = vunpack.c.l.b16 %v201
    %v462 = vunpack.c.l.b16 %v202
    %v463 = vunpack.c.l.b16 %v203
    %v464 = vunpack.c.l.b16 %v204
    %v465 = vunpack.c.l.b16 %v205
    %v466 = vunpack.c.l.b16 %v206
    %v467 = vunpack.c.l.b16 %v207
    %v468 = vunpack.c.l.b16 %v208
    %v469 = vunpack.c.l.b16 %v209
    %v470 = vunpack.c.l.b16 %v210
    %v471 = vunpack.c.l.b16 %v211
    %v472 = vunpack.c.l.b16 %v212
    %v473 = vunpack.c.l.b16 %v213
    %v474 = vunpack.c.l.b16 %v214
    %v475 = vunpack.c.l.b16 %v215
    %v476 = vunpack.c.l.b16 %v216
    %v477 = vunpack.c.l.b16 %v217
    %v478 = vunpack.c.l.b16 %v218
    %v479 = vunpack.c.l.b16 %v219
    %v480 = vunpack.c.l.b16 %v220
    %v481 = vunpack.c.l.b16 %v221
    %v482 = vunpack.c.l.b16 %v222
    %v483 = vunpack.c.l.b16 %v223
    %v484 = vunpack.c.l.b16 %v224
    %v485 = vunpack.c.l.b16 %v225
    %v486 = vunpack.c.l.b16 %v226
    %v487 = vunpack.c.l.b16 %v227
    %v488 = vunpack.c.l.b16 %v228
    %v489 = vunpack.c.l.b16 %v229
    %v490 = vunpack.c.l.b16 %v230
    %v491 = vunpack.c.l.b16 %v231
    %v492 = vunpack.c.l.b16 %v232
    %v493 = vunpack.c.l.b16 %v233
    %v494 = vunpack.c.l.b16 %v234
    %v495 = vunpack.c.l.b16 %v235
    %v496 = vunpack.c.l.b16 %v236
    %v497 = vunpack.c.l.b16 %v237
    %v498 = vunpack.c.l.b16 %v238
    %v499 = vunpack.c.l.b16 %v239
    %v500 = vunpack.c.l.b16 %v240
    %v501 = vunpack.c.l.b16 %v241
    %v502 = vunpack.c.l.b16 %v242
    %v503 = vunpack.c.l.b16 %v243
    %v504 = vunpack.c.l.b16 %v244
    %v505 = vunpack.c.l.b16 %v245
    %v506 = vunpack.c.l.b16 %v246
    %v507 = vunpack.c.l.b16 %v247
    %v508 = vunpack.c.l.b16 %v248
    %v509 = vunpack.c.l.b16 %v249
    %v510 = vunpack.c.l.b16 %v250
    %v511 = vunpack.c.l.b16 %v251
    %v512 = vunpack.c.l.b16 %v252
    %v513 = vunpack.c.l.b16 %v253
    %v514 = vunpack.c.l.b16 %v254
    %v515 = vunpack.c.l.b16 %v255
    %v516 = vunpack.c.l.b16 %v256
    %v517 = vunpack.c.l.b16 %v257
    %v518 = vunpack.c.l.b16 %v258
    %v519 = vunpack.c.l.b16 %v259
    %v520 = vunpack.c.l.b16 %v260
    %v521 = vunpack.c.l.b16 %v261
    %v522 = vunpack.c.l.b16 %v262
    %v523 = vunpack.c.l.b16 %v263
    %v524 = vunpack.c.l.b16 %v264
    %v525 = vunpack.c.l.b16 %v265
    %v526 = vunpack.c.l.b16 %v266
    %v527 = vunpack.c.l.b16 %v267
    %v528 = vunpack.c.l.b16 %v268
    %v529 = vunpack.c.l.b16 %v269
    %v530 = vunpack.c.l.b16 %v270
    %v531 = vunpack.c.l.b16 %v271
    %v532 = vunpack.c.l.b16 %v272
    %v533 = vunpack.c.l.b16 %v273
    %v534 = vunpack.c.l.b16 %v274
    %v535 = vunpack.c.l.b16 %v275
    %v536 = vunpack.c.l.b16 %v276
    %v537 = vunpack.c.l.b16 %v277
    %v538 = vpack.c.b16 %v411, %v410
    %v539 = vpack.c.b16 %v413, %v412
    %v540 = vpack.c.b16 %v415, %v414
    %v541 = vpack.c.b16 %v417, %v416
    %v542 = vpack.c.b16 %v419, %v418
    %v543 = vpack.c.b16 %v421, %v420
    %v544 = vpack.c.b16 %v423, %v422
    %v545 = vpack.c.b16 %v425, %v424
    %v546 = vpack.c.b16 %v427, %v426
    %v547 = vpack.c.b16 %v429, %v428
    %v548 = vpack.c.b16 %v431, %v430
    %v549 = vpack.c.b16 %v433, %v432
    %v550 = vpack.c.b16 %v435, %v434
    %v551 = vpack.c.b16 %v437, %v436
    %v552 = vpack.c.b16 %v439, %v438
    %v553 = vpack.c.b16 %v441, %v440
    %v554 = vpack.c.b16 %v443, %v442
    %v555 = vpack.c.b16 %v445, %v444
    %v556 = vpack.c.b16 %v447, %v446
    %v557 = vpack.c.b16 %v449, %v448
    %v558 = vpack.c.b16 %v451, %v450
    %v559 = vpack.c.b16 %v453, %v452
    %v560 = vpack.c.b16 %v455, %v454
    %v561 = vpack.c.b16 %v457, %v456
    %v562 = vpack.c.b16 %v459, %v458
    %v563 = vpack.c.b16 %v461, %v460
    %v564 = vpack.c.b16 %v463, %v462
    %v565 = vpack.c.b16 %v465, %v464
    %v566 = vpack.c.b16 %v467, %v466
    %v567 = vpack.c.b16 %v469, %v468
    %v568 = vpack.c.b16 %v471, %v470
    %v569 = vpack.c.b16 %v473, %v472
    %v570 = vpack.c.b16 %v475, %v474
    %v571 = vpack.c.b16 %v477, %v476
    %v572 = vpack.c.b16 %v479, %v478
    %v573 = vpack.c.b16 %v481, %v480
    %v574 = vpack.c.b16 %v483, %v482
    %v575 = vpack.c.b16 %v485, %v484
    %v576 = vpack.c.b16 %v487, %v486
    %v577 = vpack.c.b16 %v489, %v488
    %v578 = vpack.c.b16 %v491, %v490
    %v579 = vpack.c.b16 %v493, %v492
    %v580 = vpack.c.b16 %v495, %v494
    %v581 = vpack.c.b16 %v497, %v496
    %v582 = vpack.c.b16 %v499, %v498
    %v583 = vpack.c.b16 %v501, %v500
    %v584 = vpack.c.b16 %v503, %v502
    %v585 = vpack.c.b16 %v505, %v504
    %v586 = vpack.c.b16 %v507, %v506
    %v587 = vpack.c.b16 %v509, %v508
    %v588 = vpack.c.b16 %v511, %v510
    %v589 = vpack.c.b16 %v513, %v512
    %v590 = vpack.c.b16 %v515, %v514
    %v591 = vpack.c.b16 %v517, %v516
    %v592 = vpack.c.b16 %v519, %v518
    %v593 = vpack.c.b16 %v521, %v520
    %v594 = vpack.c.b16 %v523, %v522
    %v595 = vpack.c.b16 %v525, %v524
    %v596 = vpack.c.b16 %v527, %v526
    %v597 = vpack.c.b16 %v529, %v528
    %v598 = vpack.c.b16 %v531, %v530
    %v599 = vpack.c.b16 %v533, %v532
    %v600 = vpack.c.b16 %v535, %v534
    %v601 = vpack.c.b16 %v537, %v536
    %666 = vmatpush.bf16.msra.mxu0 %v545
    %667 = vmatpush.bf16.msra.mxu0 %v544
    %668 = vmatpush.bf16.msra.mxu0 %v543
    %669 = vmatpush.bf16.msra.mxu0 %v542
    %670 = vmatpush.bf16.msra.mxu0 %v541
    %671 = vmatpush.bf16.msra.mxu0 %v540
    %672 = vmatpush.bf16.msra.mxu0 %v539
    %673 = vmatpush.bf16.msra.mxu0 %v538
    %674 = vmatmul.bf16.gmra.mxu0 %v142
    %v675 = vpop.f32.mrf.mxu0
    %v676 = vadd.f32 %v280, %v675
    %v677 = vpop.f32.mrf.mxu0
    %678 = vdwg.mxu0
    %679 = vmatpush.bf16.msra.mxu0 %v553
    %680 = vmatpush.bf16.msra.mxu0 %v552
    %681 = vmatpush.bf16.msra.mxu0 %v551
    %682 = vmatpush.bf16.msra.mxu0 %v550
    %683 = vmatpush.bf16.msra.mxu0 %v549
    %684 = vmatpush.bf16.msra.mxu0 %v548
    %685 = vmatpush.bf16.msra.mxu0 %v547
    %686 = vmatpush.bf16.msra.mxu0 %v546
    %687 = vmatmul.bf16.gmra.mxu0 %v143
    %v688 = vpop.f32.mrf.mxu0
    %v689 = vadd.f32 %v676, %v688
    %v690 = vpop.f32.mrf.mxu0
    %691 = vdwg.mxu0
    %692 = vmatpush.bf16.msra.mxu0 %v561
    %693 = vmatpush.bf16.msra.mxu0 %v560
    %694 = vmatpush.bf16.msra.mxu0 %v559
    %695 = vmatpush.bf16.msra.mxu0 %v558
    %696 = vmatpush.bf16.msra.mxu0 %v557
    %697 = vmatpush.bf16.msra.mxu0 %v556
    %698 = vmatpush.bf16.msra.mxu0 %v555
    %699 = vmatpush.bf16.msra.mxu0 %v554
    %700 = vmatmul.bf16.gmra.mxu0 %v144
    %v701 = vpop.f32.mrf.mxu0
    %v702 = vadd.f32 %v689, %v701
    %v703 = vpop.f32.mrf.mxu0
    %704 = vdwg.mxu0
    %705 = vmatpush.bf16.msra.mxu0 %v569
    %706 = vmatpush.bf16.msra.mxu0 %v568
    %707 = vmatpush.bf16.msra.mxu0 %v567
    %708 = vmatpush.bf16.msra.mxu0 %v566
    %709 = vmatpush.bf16.msra.mxu0 %v565
    %710 = vmatpush.bf16.msra.mxu0 %v564
    %711 = vmatpush.bf16.msra.mxu0 %v563
    %712 = vmatpush.bf16.msra.mxu0 %v562
    %713 = vmatmul.bf16.gmra.mxu0 %v145
    %v714 = vpop.f32.mrf.mxu0
    %v715 = vadd.f32 %v702, %v714
    %v716 = vpop.f32.mrf.mxu0
    %717 = vdwg.mxu0
    %718 = vmatpush.bf16.msra.mxu0 %v577
    %719 = vmatpush.bf16.msra.mxu0 %v576
    %720 = vmatpush.bf16.msra.mxu0 %v575
    %721 = vmatpush.bf16.msra.mxu0 %v574
    %722 = vmatpush.bf16.msra.mxu0 %v573
    %723 = vmatpush.bf16.msra.mxu0 %v572
    %724 = vmatpush.bf16.msra.mxu0 %v571
    %725 = vmatpush.bf16.msra.mxu0 %v570
    %726 = vmatmul.bf16.gmra.mxu0 %v146
    %v727 = vpop.f32.mrf.mxu0
    %v728 = vadd.f32 %v715, %v727
    %v729 = vpop.f32.mrf.mxu0
    %730 = vdwg.mxu0
    %731 = vmatpush.bf16.msra.mxu0 %v585
    %732 = vmatpush.bf16.msra.mxu0 %v584
    %733 = vmatpush.bf16.msra.mxu0 %v583
    %734 = vmatpush.bf16.msra.mxu0 %v582
    %735 = vmatpush.bf16.msra.mxu0 %v581
    %736 = vmatpush.bf16.msra.mxu0 %v580
    %737 = vmatpush.bf16.msra.mxu0 %v579
    %738 = vmatpush.bf16.msra.mxu0 %v578
    %739 = vmatmul.bf16.gmra.mxu0 %v147
    %v740 = vpop.f32.mrf.mxu0
    %v741 = vadd.f32 %v728, %v740
    %v742 = vpop.f32.mrf.mxu0
    %743 = vdwg.mxu0
    %744 = vmatpush.bf16.msra.mxu0 %v593
    %745 = vmatpush.bf16.msra.mxu0 %v592
    %746 = vmatpush.bf16.msra.mxu0 %v591
    %747 = vmatpush.bf16.msra.mxu0 %v590
    %748 = vmatpush.bf16.msra.mxu0 %v589
    %749 = vmatpush.bf16.msra.mxu0 %v588
    %750 = vmatpush.bf16.msra.mxu0 %v587
    %751 = vmatpush.bf16.msra.mxu0 %v586
    %752 = vmatmul.bf16.gmra.mxu0 %v148
    %v753 = vpop.f32.mrf.mxu0
    %v754 = vadd.f32 %v741, %v753
    %v755 = vpop.f32.mrf.mxu0
    %756 = vdwg.mxu0
    %757 = vmatpush.bf16.msra.mxu0 %v601
    %758 = vmatpush.bf16.msra.mxu0 %v600
    %759 = vmatpush.bf16.msra.mxu0 %v599
    %760 = vmatpush.bf16.msra.mxu0 %v598
    %761 = vmatpush.bf16.msra.mxu0 %v597
    %762 = vmatpush.bf16.msra.mxu0 %v596
    %763 = vmatpush.bf16.msra.mxu0 %v595
    %764 = vmatpush.bf16.msra.mxu0 %v594
    %765 = vmatmul.bf16.gmra.mxu0 %v149
    %v766 = vpop.f32.mrf.mxu0
    %v767 = vadd.f32 %v754, %v766
    %v768 = vpop.f32.mrf.mxu0
    %769 = vdwg.mxu0
    %v770 = vtanh.pop %v767
    %v771 = vpack.c.bf16 %v770, %v770
    %v772 = vld [vmem:[#allocation12] sm:$0xf]
    %v773 = vld [vmem:[#allocation12 + $0x4] sm:$0xf]
    %v774 = vld [vmem:[#allocation12 + $0x8] sm:$0xf]
    %v775 = vld [vmem:[#allocation12 + $0xc] sm:$0xf]
    %v776 = vld [vmem:[#allocation12 + $0x10] sm:$0xf]
    %v777 = vld [vmem:[#allocation12 + $0x14] sm:$0xf]
    %v778 = vld [vmem:[#allocation12 + $0x18] sm:$0xf]
    %v779 = vld [vmem:[#allocation12 + $0x1c] sm:$0xf]
    %v780 = vld [vmem:[#allocation12 + $0x20] sm:$0xf]
    %v781 = vld [vmem:[#allocation12 + $0x24] sm:$0xf]
    %v782 = vld [vmem:[#allocation12 + $0x28] sm:$0xf]
    %v783 = vld [vmem:[#allocation12 + $0x2c] sm:$0xf]
    %v784 = vld [vmem:[#allocation12 + $0x30] sm:$0xf]
    %v785 = vld [vmem:[#allocation12 + $0x34] sm:$0xf]
    %v786 = vld [vmem:[#allocation12 + $0x38] sm:$0xf]
    %v787 = vld [vmem:[#allocation12 + $0x3c] sm:$0xf]
    %v788 = vld [vmem:[%s7] sm:$0x1]
    %v790 = vperm.slane %v788, 0
    %v808 = vunpack.c.l.b16 %v772
    %v809 = vunpack.c.l.b16 %v773
    %v810 = vunpack.c.l.b16 %v774
    %v811 = vunpack.c.l.b16 %v775
    %v812 = vunpack.c.l.b16 %v776
    %v813 = vunpack.c.l.b16 %v777
    %v814 = vunpack.c.l.b16 %v778
    %v815 = vunpack.c.l.b16 %v779
    %v816 = vunpack.c.l.b16 %v780
    %v817 = vunpack.c.l.b16 %v781
    %v818 = vunpack.c.l.b16 %v782
    %v819 = vunpack.c.l.b16 %v783
    %v820 = vunpack.c.l.b16 %v784
    %v821 = vunpack.c.l.b16 %v785
    %v822 = vunpack.c.l.b16 %v786
    %v823 = vunpack.c.l.b16 %v787
    %v824 = vpack.c.b16 %v809, %v808
    %v825 = vpack.c.b16 %v811, %v810
    %v826 = vpack.c.b16 %v813, %v812
    %v827 = vpack.c.b16 %v815, %v814
    %v828 = vpack.c.b16 %v817, %v816
    %v829 = vpack.c.b16 %v819, %v818
    %v830 = vpack.c.b16 %v821, %v820
    %v831 = vpack.c.b16 %v823, %v822
    %840 = vmatpush.bf16.msra.mxu0 %v831
    %841 = vmatpush.bf16.msra.mxu0 %v830
    %842 = vmatpush.bf16.msra.mxu0 %v829
    %843 = vmatpush.bf16.msra.mxu0 %v828
    %844 = vmatpush.bf16.msra.mxu0 %v827
    %845 = vmatpush.bf16.msra.mxu0 %v826
    %846 = vmatpush.bf16.msra.mxu0 %v825
    %847 = vmatpush.bf16.msra.mxu0 %v824
    %848 = vmatmul.bf16.gmra.mxu0 %v771
    %v849 = vpop.f32.mrf.mxu0
    %v850 = vadd.f32 %v790, %v849
    %v851 = vpop.f32.mrf.mxu0
    %852 = vdwg.mxu0
    %v853 = vld [vmem:[#allocation11] sm:$0xf]
    %v854 = vld [vmem:[#allocation11 + $0x4] sm:$0xf]
    %v855 = vld [vmem:[#allocation11 + $0x8] sm:$0xf]
    %v856 = vld [vmem:[#allocation11 + $0xc] sm:$0xf]
    %v857 = vld [vmem:[#allocation11 + $0x10] sm:$0xf]
    %v858 = vld [vmem:[#allocation11 + $0x14] sm:$0xf]
    %v859 = vld [vmem:[#allocation11 + $0x18] sm:$0xf]
    %v860 = vld [vmem:[#allocation11 + $0x1c] sm:$0xf]
    %v861 = vld [vmem:[#allocation11 + $0x20] sm:$0xf]
    %v862 = vld [vmem:[#allocation11 + $0x24] sm:$0xf]
    %v863 = vld [vmem:[#allocation11 + $0x28] sm:$0xf]
    %v864 = vld [vmem:[#allocation11 + $0x2c] sm:$0xf]
    %v865 = vld [vmem:[#allocation11 + $0x30] sm:$0xf]
    %v866 = vld [vmem:[#allocation11 + $0x34] sm:$0xf]
    %v867 = vld [vmem:[#allocation11 + $0x38] sm:$0xf]
    %v868 = vld [vmem:[#allocation11 + $0x3c] sm:$0xf]
    %v869 = vld [vmem:[%s6] sm:$0x1]
    %v870 = vld [vmem:[#allocation14] sm:$0xff]
    %s871 = smul.u32 8, 1
    %s872 = sshll.u32 %s871, 4
    %873 = dma.done [#allocation3], %s872
    %s874 = scalar_lea.hbm %s9, 8
    %s875 = scalar_lea.vmem [#allocation2], 8
    %s876 = scalar_lea.sflag [#allocation3], 1
    // Predicated region
    $region66: #{tpu_custom_call.1} parent=1 // pred_check
      _
    $region67: #{tpu_custom_call.1} parent=1 // pred_check_branch
      %878 = sbr.rel target = $region69
    $region68: #{tpu_custom_call.1} parent=1 // pred_region
      %879 = sst [smem:[#allocation18]] [#allocation21]
      %880 = sst [smem:[#allocation19]] [#allocation20]
    $region69: #{tpu_custom_call.1} parent=1 // pred_fallthru
      _
    %882 = shalt.err (0)
    %s884 = sshll.u32 %s874, 4
    %s885 = int_to_ptr.hbm [resolvable:$true] %s884
    %s886 = sshll.u32 %s875, 4
    %s887 = int_to_ptr.vmem [resolvable:$true] %s886
    %889 = dma.hbm_to_vmem [thread:$0]  %s885, 128, %s887, %s876
    %s890 = sld [smem:[#allocation4]]
    %s891 = sld [smem:[#allocation4 + $0x80]]
    %s892 = sld [smem:[#allocation4 + $0x100]]
    %s893 = sld [smem:[#allocation4 + $0x180]]
    %v894 = vpack.c.bf16 %v870, %v870
    %v911 = vunpack.c.l.b16 %v853
    %v912 = vunpack.c.l.b16 %v854
    %v913 = vunpack.c.l.b16 %v855
    %v914 = vunpack.c.l.b16 %v856
    %v915 = vunpack.c.l.b16 %v857
    %v916 = vunpack.c.l.b16 %v858
    %v917 = vunpack.c.l.b16 %v859
    %v918 = vunpack.c.l.b16 %v860
    %v919 = vunpack.c.l.b16 %v861
    %v920 = vunpack.c.l.b16 %v862
    %v921 = vunpack.c.l.b16 %v863
    %v922 = vunpack.c.l.b16 %v864
    %v923 = vunpack.c.l.b16 %v865
    %v924 = vunpack.c.l.b16 %v866
    %v925 = vunpack.c.l.b16 %v867
    %v926 = vunpack.c.l.b16 %v868
    %v927 = vpack.c.b16 %v912, %v911
    %v928 = vpack.c.b16 %v914, %v913
    %v929 = vpack.c.b16 %v916, %v915
    %v930 = vpack.c.b16 %v918, %v917
    %v931 = vpack.c.b16 %v920, %v919
    %v932 = vpack.c.b16 %v922, %v921
    %v933 = vpack.c.b16 %v924, %v923
    %v934 = vpack.c.b16 %v926, %v925
    %943 = vmatpush.bf16.msra.mxu0 %v934
    %944 = vmatpush.bf16.msra.mxu0 %v933
    %945 = vmatpush.bf16.msra.mxu0 %v932
    %946 = vmatpush.bf16.msra.mxu0 %v931
    %947 = vmatpush.bf16.msra.mxu0 %v930
    %948 = vmatpush.bf16.msra.mxu0 %v929
    %949 = vmatpush.bf16.msra.mxu0 %v928
    %950 = vmatpush.bf16.msra.mxu0 %v927
    %951 = vmatmul.bf16.gmra.mxu0 %v894
    %v952 = vpop.f32.mrf.mxu0
    %v953 = vadd.f32 %v850, %v952
    %v954 = vpop.f32.mrf.mxu0
    %955 = vdwg.mxu0
    %v956 = vstv %s893
    %v957 = vmul.f32 %v956, %v869
    %v959 = vperm.slane %v957, 0
    %v961 = vadd.f32 %v953, %v959
    %v962 = vtanh.pop %v961
    %v963 = vstv %s890
    %v964 = vmul.f32 %v963, %v962
    %v965 = vstv %s891
    %v966 = vmul.f32 %v965, %v870
    %v967 = vadd.f32 %v964, %v966
    %v968 = vld [vmem:[#allocation2] sm:$0xff]
    %v969 = vstv %s892
    %v970 = vmul.f32 %v968, %v969
    %v971 = vadd.f32 %v967, %v970
    %s972 = sshll.u32 %s871, 4
    %973 = dma.done %s876, %s972
    %s974 = scalar_lea.hbm %s9, 16
    // Predicated region
    $region70: #{tpu_custom_call.1} parent=1 // pred_check
      _
    $region71: #{tpu_custom_call.1} parent=1 // pred_check_branch
      %976 = sbr.rel target = $region73
    $region72: #{tpu_custom_call.1} parent=1 // pred_region
      %977 = sst [smem:[#allocation18]] [#allocation23]
      %978 = sst [smem:[#allocation19]] [#allocation22]
    $region73: #{tpu_custom_call.1} parent=1 // pred_fallthru
      _
    %980 = shalt.err (0)
    %s982 = sshll.u32 %s974, 4
    %s983 = int_to_ptr.hbm [resolvable:$true] %s982
    %s984 = sshll.u32 [#allocation2], 4
    %s985 = int_to_ptr.vmem [resolvable:$true] %s984
    %987 = dma.hbm_to_vmem [thread:$0]  %s983, 128, %s985, [#allocation3]
    %s988 = sld [smem:[#allocation4 + $0x1]]
    %s989 = sld [smem:[#allocation4 + $0x81]]
    %s990 = sld [smem:[#allocation4 + $0x101]]
    %s991 = sld [smem:[#allocation4 + $0x181]]
    %v992 = vpack.c.bf16 %v971, %v971
    %993 = vmatpush.bf16.msra.mxu0 %v934
    %994 = vmatpush.bf16.msra.mxu0 %v933
    %995 = vmatpush.bf16.msra.mxu0 %v932
    %996 = vmatpush.bf16.msra.mxu0 %v931
    %997 = vmatpush.bf16.msra.mxu0 %v930
    %998 = vmatpush.bf16.msra.mxu0 %v929
    %999 = vmatpush.bf16.msra.mxu0 %v928
    %1000 = vmatpush.bf16.msra.mxu0 %v927
    %1001 = vmatmul.bf16.gmra.mxu0 %v992
    %v1002 = vpop.f32.mrf.mxu0
    %v1003 = vadd.f32 %v850, %v1002
    %v1004 = vpop.f32.mrf.mxu0
    %1005 = vdwg.mxu0
    %v1006 = vstv %s991
    %v1007 = vmul.f32 %v1006, %v869
    %v1009 = vperm.slane %v1007, 0
    %v1011 = vadd.f32 %v1003, %v1009
    %v1012 = vtanh.pop %v1011
    %v1013 = vstv %s988
    %v1014 = vmul.f32 %v1013, %v1012
    %v1015 = vstv %s989
    %v1016 = vmul.f32 %v1015, %v971
    %v1017 = vadd.f32 %v1014, %v1016
    %v1018 = vld [vmem:[%s875] sm:$0xff]
    %v1019 = vstv %s990
    %v1020 = vmul.f32 %v1018, %v1019
    %v1021 = vadd.f32 %v1017, %v1020
    %s1022 = sshll.u32 %s871, 4
    %1023 = dma.done [#allocation3], %s1022
    %s1024 = scalar_lea.hbm %s9, 24
    // Predicated region
    $region74: #{tpu_custom_call.1} parent=1 // pred_check
      _
    $region75: #{tpu_custom_call.1} parent=1 // pred_check_branch
      %1026 = sbr.rel target = $region77
    $region76: #{tpu_custom_call.1} parent=1 // pred_region
      %1027 = sst [smem:[#allocation18]] [#allocation25]
      %1028 = sst [smem:[#allocation19]] [#allocation24]
    $region77: #{tpu_custom_call.1} parent=1 // pred_fallthru
      _
    %1030 = shalt.err (0)
    %s1032 = sshll.u32 %s1024, 4
    %s1033 = int_to_ptr.hbm [resolvable:$true] %s1032
    %s1034 = sshll.u32 %s875, 4
    %s1035 = int_to_ptr.vmem [resolvable:$true] %s1034
    %1037 = dma.hbm_to_vmem [thread:$0]  %s1033, 128, %s1035, %s876
    %s1038 = sld [smem:[#allocation4 + $0x2]]
    %s1039 = sld [smem:[#allocation4 + $0x82]]
    %s1040 = sld [smem:[#allocation4 + $0x102]]
    %s1041 = sld [smem:[#allocation4 + $0x182]]
    %v1042 = vpack.c.bf16 %v1021, %v1021
    %1043 = vmatpush.bf16.msra.mxu0 %v934
    %1044 = vmatpush.bf16.msra.mxu0 %v933
    %1045 = vmatpush.bf16.msra.mxu0 %v932
    %1046 = vmatpush.bf16.msra.mxu0 %v931
    %1047 = vmatpush.bf16.msra.mxu0 %v930
    %1048 = vmatpush.bf16.msra.mxu0 %v929
    %1049 = vmatpush.bf16.msra.mxu0 %v928
    %1050 = vmatpush.bf16.msra.mxu0 %v927
    %1051 = vmatmul.bf16.gmra.mxu0 %v1042
    %v1052 = vpop.f32.mrf.mxu0
    %v1053 = vadd.f32 %v850, %v1052
    %v1054 = vpop.f32.mrf.mxu0
    %1055 = vdwg.mxu0
    %v1056 = vstv %s1041
    %v1057 = vmul.f32 %v1056, %v869
    %v1059 = vperm.slane %v1057, 0
    %v1061 = vadd.f32 %v1053, %v1059
    %v1062 = vtanh.pop %v1061
    %v1063 = vstv %s1038
    %v1064 = vmul.f32 %v1063, %v1062
    %v1065 = vstv %s1039
    %v1066 = vmul.f32 %v1065, %v1021
    %v1067 = vadd.f32 %v1064, %v1066
    %v1068 = vld [vmem:[#allocation2] sm:$0xff]
    %v1069 = vstv %s1040
    %v1070 = vmul.f32 %v1068, %v1069
    %v1071 = vadd.f32 %v1067, %v1070
    %s1072 = sshll.u32 %s871, 4
    %1073 = dma.done %s876, %s1072
    %s1074 = scalar_lea.hbm %s9, 32
    // Predicated region
    $region78: #{tpu_custom_call.1} parent=1 // pred_check
      _
    $region79: #{tpu_custom_call.1} parent=1 // pred_check_branch
      %1076 = sbr.rel target = $region81
    $region80: #{tpu_custom_call.1} parent=1 // pred_region
      %1077 = sst [smem:[#allocation18]] [#allocation27]
      %1078 = sst [smem:[#allocation19]] [#allocation26]
    $region81: #{tpu_custom_call.1} parent=1 // pred_fallthru
      _
    %1080 = shalt.err (0)
    %s1082 = sshll.u32 %s1074, 4
    %s1083 = int_to_ptr.hbm [resolvable:$true] %s1082
    %s1084 = sshll.u32 [#allocation2], 4
    %s1085 = int_to_ptr.vmem [resolvable:$true] %s1084
    %1087 = dma.hbm_to_vmem [thread:$0]  %s1083, 128, %s1085, [#allocation3]
    %s1088 = sld [smem:[#allocation4 + $0x3]]
    %s1089 = sld [smem:[#allocation4 + $0x83]]
    %s1090 = sld [smem:[#allocation4 + $0x103]]
    %s1091 = sld [smem:[#allocation4 + $0x183]]
    %v1092 = vpack.c.bf16 %v1071, %v1071
    %1093 = vmatpush.bf16.msra.mxu0 %v934
    %1094 = vmatpush.bf16.msra.mxu0 %v933
    %1095 = vmatpush.bf16.msra.mxu0 %v932
    %1096 = vmatpush.bf16.msra.mxu0 %v931
    %1097 = vmatpush.bf16.msra.mxu0 %v930
    %1098 = vmatpush.bf16.msra.mxu0 %v929
    %1099 = vmatpush.bf16.msra.mxu0 %v928
    %1100 = vmatpush.bf16.msra.mxu0 %v927
    %1101 = vmatmul.bf16.gmra.mxu0 %v1092
    %v1102 = vpop.f32.mrf.mxu0
    %v1103 = vadd.f32 %v850, %v1102
    %v1104 = vpop.f32.mrf.mxu0
    %1105 = vdwg.mxu0
    %v1106 = vstv %s1091
    %v1107 = vmul.f32 %v1106, %v869
    %v1109 = vperm.slane %v1107, 0
    %v1111 = vadd.f32 %v1103, %v1109
    %v1112 = vtanh.pop %v1111
    %v1113 = vstv %s1088
    %v1114 = vmul.f32 %v1113, %v1112
    %v1115 = vstv %s1089
    %v1116 = vmul.f32 %v1115, %v1071
    %v1117 = vadd.f32 %v1114, %v1116
    %v1118 = vld [vmem:[%s875] sm:$0xff]
    %v1119 = vstv %s1090
    %v1120 = vmul.f32 %v1118, %v1119
    %v1121 = vadd.f32 %v1117, %v1120
    %s1122 = sshll.u32 %s871, 4
    %1123 = dma.done [#allocation3], %s1122
    %s1124 = scalar_lea.hbm %s9, 40
    // Predicated region
    $region82: #{tpu_custom_call.1} parent=1 // pred_check
      _
    $region83: #{tpu_custom_call.1} parent=1 // pred_check_branch
      %1126 = sbr.rel target = $region85
    $region84: #{tpu_custom_call.1} parent=1 // pred_region
      %1127 = sst [smem:[#allocation18]] [#allocation29]
      %1128 = sst [smem:[#allocation19]] [#allocation28]
    $region85: #{tpu_custom_call.1} parent=1 // pred_fallthru
      _
    %1130 = shalt.err (0)
    %s1132 = sshll.u32 %s1124, 4
    %s1133 = int_to_ptr.hbm [resolvable:$true] %s1132
    %s1134 = sshll.u32 %s875, 4
    %s1135 = int_to_ptr.vmem [resolvable:$true] %s1134
    %1137 = dma.hbm_to_vmem [thread:$0]  %s1133, 128, %s1135, %s876
    %s1138 = sld [smem:[#allocation4 + $0x4]]
    %s1139 = sld [smem:[#allocation4 + $0x84]]
    %s1140 = sld [smem:[#allocation4 + $0x104]]
    %s1141 = sld [smem:[#allocation4 + $0x184]]
    %v1142 = vpack.c.bf16 %v1121, %v1121
    %1143 = vmatpush.bf16.msra.mxu0 %v934
    %1144 = vmatpush.bf16.msra.mxu0 %v933
    %1145 = vmatpush.bf16.msra.mxu0 %v932
    %1146 = vmatpush.bf16.msra.mxu0 %v931
    %1147 = vmatpush.bf16.msra.mxu0 %v930
    %1148 = vmatpush.bf16.msra.mxu0 %v929
    %1149 = vmatpush.bf16.msra.mxu0 %v928
    %1150 = vmatpush.bf16.msra.mxu0 %v927
    %1151 = vmatmul.bf16.gmra.mxu0 %v1142
    %v1152 = vpop.f32.mrf.mxu0
    %v1153 = vadd.f32 %v850, %v1152
    %v1154 = vpop.f32.mrf.mxu0
    %1155 = vdwg.mxu0
    %v1156 = vstv %s1141
    %v1157 = vmul.f32 %v1156, %v869
    %v1159 = vperm.slane %v1157, 0
    %v1161 = vadd.f32 %v1153, %v1159
    %v1162 = vtanh.pop %v1161
    %v1163 = vstv %s1138
    %v1164 = vmul.f32 %v1163, %v1162
    %v1165 = vstv %s1139
    %v1166 = vmul.f32 %v1165, %v1121
    %v1167 = vadd.f32 %v1164, %v1166
    %v1168 = vld [vmem:[#allocation2] sm:$0xff]
    %v1169 = vstv %s1140
    %v1170 = vmul.f32 %v1168, %v1169
    %v1171 = vadd.f32 %v1167, %v1170
    %s1172 = sshll.u32 %s871, 4
    %1173 = dma.done %s876, %s1172
    %s1174 = scalar_lea.hbm %s9, 48
    // Predicated region
    $region86: #{tpu_custom_call.1} parent=1 // pred_check
      _
    $region87: #{tpu_custom_call.1} parent=1 // pred_check_branch
      %1176 = sbr.rel target = $region89
    $region88: #{tpu_custom_call.1} parent=1 // pred_region
      %1177 = sst [smem:[#allocation18]] [#allocation31]
      %1178 = sst [smem:[#allocation19]] [#allocation30]
    $region89: #{tpu_custom_call.1} parent=1 // pred_fallthru
      _
    %1180 = shalt.err (0)
    %s1182 = sshll.u32 %s1174, 4
    %s1183 = int_to_ptr.hbm [resolvable:$true] %s1182
    %s1184 = sshll.u32 [#allocation2], 4
    %s1185 = int_to_ptr.vmem [resolvable:$true] %s1184
    %1187 = dma.hbm_to_vmem [thread:$0]  %s1183, 128, %s1185, [#allocation3]
    %s1188 = sld [smem:[#allocation4 + $0x5]]
    %s1189 = sld [smem:[#allocation4 + $0x85]]
    %s1190 = sld [smem:[#allocation4 + $0x105]]
    %s1191 = sld [smem:[#allocation4 + $0x185]]
    %v1192 = vpack.c.bf16 %v1171, %v1171
    %1193 = vmatpush.bf16.msra.mxu0 %v934
    %1194 = vmatpush.bf16.msra.mxu0 %v933
    %1195 = vmatpush.bf16.msra.mxu0 %v932
    %1196 = vmatpush.bf16.msra.mxu0 %v931
    %1197 = vmatpush.bf16.msra.mxu0 %v930
    %1198 = vmatpush.bf16.msra.mxu0 %v929
    %1199 = vmatpush.bf16.msra.mxu0 %v928
    %1200 = vmatpush.bf16.msra.mxu0 %v927
    %1201 = vmatmul.bf16.gmra.mxu0 %v1192
    %v1202 = vpop.f32.mrf.mxu0
    %v1203 = vadd.f32 %v850, %v1202
    %v1204 = vpop.f32.mrf.mxu0
    %1205 = vdwg.mxu0
    %v1206 = vstv %s1191
    %v1207 = vmul.f32 %v1206, %v869
    %v1209 = vperm.slane %v1207, 0
    %v1211 = vadd.f32 %v1203, %v1209
    %v1212 = vtanh.pop %v1211
    %v1213 = vstv %s1188
    %v1214 = vmul.f32 %v1213, %v1212
    %v1215 = vstv %s1189
    %v1216 = vmul.f32 %v1215, %v1171
    %v1217 = vadd.f32 %v1214, %v1216
    %v1218 = vld [vmem:[%s875] sm:$0xff]
    %v1219 = vstv %s1190
    %v1220 = vmul.f32 %v1218, %v1219
    %v1221 = vadd.f32 %v1217, %v1220
    %s1222 = sshll.u32 %s871, 4
    %1223 = dma.done [#allocation3], %s1222
    %s1224 = scalar_lea.hbm %s9, 56
    // Predicated region
    $region90: #{tpu_custom_call.1} parent=1 // pred_check
      _
    $region91: #{tpu_custom_call.1} parent=1 // pred_check_branch
      %1226 = sbr.rel target = $region93
    $region92: #{tpu_custom_call.1} parent=1 // pred_region
      %1227 = sst [smem:[#allocation18]] [#allocation33]
      %1228 = sst [smem:[#allocation19]] [#allocation32]
    $region93: #{tpu_custom_call.1} parent=1 // pred_fallthru
      _
    %1230 = shalt.err (0)
    %s1232 = sshll.u32 %s1224, 4
    %s1233 = int_to_ptr.hbm [resolvable:$true] %s1232
    %s1234 = sshll.u32 %s875, 4
    %s1235 = int_to_ptr.vmem [resolvable:$true] %s1234
    %1237 = dma.hbm_to_vmem [thread:$0]  %s1233, 128, %s1235, %s876
    %s1238 = sld [smem:[#allocation4 + $0x6]]
    %s1239 = sld [smem:[#allocation4 + $0x86]]
    %s1240 = sld [smem:[#allocation4 + $0x106]]
    %s1241 = sld [smem:[#allocation4 + $0x186]]
    %v1242 = vpack.c.bf16 %v1221, %v1221
    %1243 = vmatpush.bf16.msra.mxu0 %v934
    %1244 = vmatpush.bf16.msra.mxu0 %v933
    %1245 = vmatpush.bf16.msra.mxu0 %v932
    %1246 = vmatpush.bf16.msra.mxu0 %v931
    %1247 = vmatpush.bf16.msra.mxu0 %v930
    %1248 = vmatpush.bf16.msra.mxu0 %v929
    %1249 = vmatpush.bf16.msra.mxu0 %v928
    %1250 = vmatpush.bf16.msra.mxu0 %v927
    %1251 = vmatmul.bf16.gmra.mxu0 %v1242
    %v1252 = vpop.f32.mrf.mxu0
    %v1253 = vadd.f32 %v850, %v1252
    %v1254 = vpop.f32.mrf.mxu0
    %1255 = vdwg.mxu0
    %v1256 = vstv %s1241
    %v1257 = vmul.f32 %v1256, %v869
    %v1259 = vperm.slane %v1257, 0
    %v1261 = vadd.f32 %v1253, %v1259
    %v1262 = vtanh.pop %v1261
    %v1263 = vstv %s1238
    %v1264 = vmul.f32 %v1263, %v1262
    %v1265 = vstv %s1239
    %v1266 = vmul.f32 %v1265, %v1221
    %v1267 = vadd.f32 %v1264, %v1266
    %v1268 = vld [vmem:[#allocation2] sm:$0xff]
    %v1269 = vstv %s1240
    %v1270 = vmul.f32 %v1268, %v1269
    %v1271 = vadd.f32 %v1267, %v1270
    %s1272 = sshll.u32 %s871, 4
    %1273 = dma.done %s876, %s1272
    %s1274 = sld [smem:[#allocation4 + $0x7]]
    %s1275 = sld [smem:[#allocation4 + $0x87]]
    %s1276 = sld [smem:[#allocation4 + $0x107]]
    %s1277 = sld [smem:[#allocation4 + $0x187]]
    %v1278 = vpack.c.bf16 %v1271, %v1271
    %1279 = vmatpush.bf16.msra.mxu0 %v934
    %1280 = vmatpush.bf16.msra.mxu0 %v933
    %1281 = vmatpush.bf16.msra.mxu0 %v932
    %1282 = vmatpush.bf16.msra.mxu0 %v931
    %1283 = vmatpush.bf16.msra.mxu0 %v930
    %1284 = vmatpush.bf16.msra.mxu0 %v929
    %1285 = vmatpush.bf16.msra.mxu0 %v928
    %1286 = vmatpush.bf16.msra.mxu0 %v927
    %1287 = vmatmul.bf16.gmra.mxu0 %v1278
    %v1288 = vpop.f32.mrf.mxu0
    %v1289 = vadd.f32 %v850, %v1288
    %v1290 = vpop.f32.mrf.mxu0
    %1291 = vdwg.mxu0
    %v1292 = vstv %s1277
    %v1293 = vmul.f32 %v1292, %v869
    %v1295 = vperm.slane %v1293, 0
    %v1297 = vadd.f32 %v1289, %v1295
    %v1298 = vtanh.pop %v1297
    %v1299 = vstv %s1274
    %v1300 = vmul.f32 %v1299, %v1298
    %v1301 = vstv %s1275
    %v1302 = vmul.f32 %v1301, %v1271
    %v1303 = vadd.f32 %v1300, %v1302
    %v1304 = vld [vmem:[%s875] sm:$0xff]
    %v1305 = vstv %s1276
    %v1306 = vmul.f32 %v1304, %v1305
    %v1307 = vadd.f32 %v1303, %v1306
    %1308 = vst [vmem:[#allocation15] sm:$0xff] %v1307
    // Predicated region
    $region94: #{tpu_custom_call.1} parent=1 // pred_check
      _
    $region95: #{tpu_custom_call.1} parent=1 // pred_check_branch
      %1310 = sbr.rel (0) target = $region97
    $region96: #{tpu_custom_call.1} parent=1 // pred_region
      %1312 = vsyncadd [#allocation6], 0
      %s1314 = sshll.u32 [#allocation15], 4
      %s1315 = int_to_ptr.vmem [resolvable:$true] %s1314
      %s1316 = sshll.u32 %s10, 4
      %s1317 = int_to_ptr.hbm [resolvable:$true] %s1316
      %1319 = dma.vmem_to_hbm [thread:$0]  %s1315, 128, %s1317, [#allocation6]
    $region97: #{tpu_custom_call.1} parent=1 // pred_fallthru
      _
    // Predicated region
    $region98: #{tpu_custom_call.1} parent=1 // pred_check
      _
    $region99: #{tpu_custom_call.1} parent=1 // pred_check_branch
      %1321 = sbr.rel (0) target = $region101
    $region100: #{tpu_custom_call.1} parent=1 // pred_region
      %1323 = dma.done [#allocation6], 128
    $region101: #{tpu_custom_call.1} parent=1 // pred_fallthru
      _
    %1324 = vsyncpa [#allocation5], 1
    %1325 = vsyncpa [#allocation10], 1
    %1326 = vsyncpa [#allocation13], 1
    %1327 = vsyncpa [#allocation6], 1
    %1328 = vsyncpa [#allocation7], 1
  %1329 = vsyncmov [#allocation3]
  %s1330 = vpop.sfrf %1329
  %p1331 = scmp.eq.s32.totalorder %s1330, 0
  %p1332 = pneg %p1331
  %1334 = shalt.err (%p1332)
  %s1335 = scalar_lea.sflag [#allocation3], 1
  %1336 = vsyncmov %s1335
  %s1337 = vpop.sfrf %1336
  %p1338 = scmp.eq.s32.totalorder %s1337, 0
  %p1339 = pneg %p1338
  %1341 = shalt.err (%p1339)

</llo_original>
